<compile_context>
chip_gen: v5e
topology: v5e:2x2
jax: 0.10.0
libtpu: 0.0.40
codegen_flags: <defaults>
</compile_context>

<pallas_src>
import functools

import jax
import jax.numpy as jnp
from jax.experimental import pallas as pl
from jax.experimental.pallas import tpu as pltpu

LANES = 128


# ----------------------------------------------------------------------------
# Fused Pallas kernel
# ----------------------------------------------------------------------------

def _fused_forward_kernel(patches_ref, w_ref, b_ref, out_ref, feats_ref, *,
                          B, frame, ipt, HW, hidden, out_size, CKp,
                          R_W1, R_WIH, R_WHH, R_SW1, R_SW2, R_WF):
    f32 = jnp.float32
    bf16 = jnp.bfloat16
    i = pl.program_id(0)
    biases = b_ref[...]                                           # (8, 128) f32

    # ---- synthetic CNN backbone for this tile of images ---------------------
    # conv3x3 as im2col matmul (bf16 operands, f32 accumulate) + ReLU, then a
    # per-image global average pool as a reshape + sublane reduction.
    y = jnp.dot(patches_ref[...], w_ref[0:CKp, :],
                preferred_element_type=f32) + biases[0:1, :]      # (ipt*HW, 128)
    y = jnp.maximum(y, 0.0)
    pooled = jnp.sum(y.reshape(ipt, HW, LANES), axis=1) * (1.0 / HW)  # (ipt,128)
    feats_ref[pl.ds(i * ipt, ipt), :] = pooled

    # ---- head: fc1 -> LSTM -> SEBlock -> fc2 -> softmax, on the last step ----
    @pl.when(i == pl.num_programs(0) - 1)
    def _head():
        feats = feats_ref[...]                                    # (N, 128) f32
        # fc1 (zero-padded weight rows/cols keep everything 128-lane dense)
        x1 = jnp.dot(feats.astype(bf16), w_ref[R_W1:R_W1 + LANES, :],
                     preferred_element_type=f32) + biases[1:2, :]       # (N,128)
        # LSTM input projection for all timesteps in one matmul,
        # concatenated gate order i|f|g|o (PyTorch), 4*hidden == 128 lanes.
        xg = jnp.dot(x1.astype(bf16), w_ref[R_WIH:R_WIH + LANES, :],
                     preferred_element_type=f32) + biases[2:3, :]       # (N,128)
        whh = w_ref[R_WHH:R_WHH + LANES, :]            # bf16, rows >= hidden are 0

        lane = jax.lax.broadcasted_iota(jnp.int32, (B, 4 * hidden), 1)
        is_g = (lane >= 2 * hidden) & (lane < 3 * hidden)

        # 128-lane state; only lanes [0, hidden) are meaningful.  The junk in
        # the other lanes stays bounded and is nulled by the zero rows of
        # whh / sw1 / wf, so no lane slicing is needed in the recurrence.
        h = jnp.zeros((B, 4 * hidden), f32)
        c = jnp.zeros((B, 4 * hidden), f32)
        for t in range(frame):             # static unroll, frame == 2
            # rows of xg are time-major (row = t*B + b); with frame == 2 this is
            # one static sublane slice (t == 0 is offset 0) -- negligible.
            x_t = xg[t * B:(t + 1) * B, :]
            g_all = x_t + jnp.dot(h.astype(bf16), whh,
                                  preferred_element_type=f32)           # (B,128)
            # whole-vreg transcendentals + lane-index select (no 32-lane slices)
            act = jnp.where(is_g, jnp.tanh(g_all), jax.nn.sigmoid(g_all))
            # align f / g / o gate groups onto lanes [0, hidden) via XLU rolls
            f_g = pltpu.roll(act, 3 * hidden, 1)
            g_g = pltpu.roll(act, 2 * hidden, 1)
            o_g = pltpu.roll(act, 1 * hidden, 1)
            c = f_g * c + act * g_g        # lanes [0,H): f*c + i*g
            h = o_g * jnp.tanh(c)          # lanes [0,H): o*tanh(c)

        # SEBlock_2 (zero-padded weight rows kill the garbage lanes >= hidden)
        s1 = jnp.maximum(
            jnp.dot(h.astype(bf16), w_ref[R_SW1:R_SW1 + LANES, :],
                    preferred_element_type=f32) + biases[3:4, :], 0.0)
        s = jax.nn.sigmoid(
            jnp.dot(s1.astype(bf16), w_ref[R_SW2:R_SW2 + LANES, :],
                    preferred_element_type=f32) + biases[4:5, :])
        xh = h * s

        # fc2 + softmax(dim=-1) over the first out_size lanes; exact divide for
        # parity with torch.softmax (with out_size == 1 this is identically 1).
        z = jnp.dot(xh.astype(bf16), w_ref[R_WF:R_WF + LANES, :],
                    preferred_element_type=f32) + biases[5:6, :]        # (B,128)
        olane = jax.lax.broadcasted_iota(jnp.int32, z.shape, 1)
        valid = olane < out_size
        z = jnp.where(valid, z, -jnp.inf)
        z = z - jnp.max(z, axis=-1, keepdims=True)
        e = jnp.exp(z)
        p = e / jnp.sum(e, axis=-1, keepdims=True)
        out_ref[...] = jnp.where(valid, p, 0.0)                   # lane-dense store


# ----------------------------------------------------------------------------
# Parameter init (synthetic backbone + module-style inits)
# ----------------------------------------------------------------------------

def init_params(key, *, C=3, cnn_feat=32, fc1_hidden=64, lstm_hidden=32, r=8,
                output_size=1):
    ks = jax.random.split(key, 10)
    u = lambda k, shape, a: jax.random.uniform(k, shape, jnp.float32, -a, a)
    s = float(lstm_hidden) ** -0.5
    return {
        # synthetic CNN backbone (stand-in for the frozen pretrained ResNet-101)
        "conv_w": u(ks[0], (cnn_feat, C, 3, 3), 0.1),
        "conv_b": jnp.zeros((cnn_feat,), jnp.float32),
        # fc1: Linear(cnn_feat, fc1_hidden), init uniform(-0.1, 0.1), bias 0
        "fc1_w": u(ks[1], (fc1_hidden, cnn_feat), 0.1),
        "fc1_b": jnp.zeros((fc1_hidden,), jnp.float32),
        # LSTM(fc1_hidden, lstm_hidden), PyTorch default uniform(-1/sqrt(H), 1/sqrt(H))
        "lstm_w_ih": u(ks[2], (4 * lstm_hidden, fc1_hidden), s),
        "lstm_w_hh": u(ks[3], (4 * lstm_hidden, lstm_hidden), s),
        "lstm_b_ih": u(ks[4], (4 * lstm_hidden,), s),
        "lstm_b_hh": u(ks[5], (4 * lstm_hidden,), s),
        # SEBlock(lstm_hidden, r=8)
        "se2_w1": u(ks[6], (lstm_hidden // r, lstm_hidden), 0.1),
        "se2_b1": jnp.zeros((lstm_hidden // r,), jnp.float32),
        "se2_w2": u(ks[7], (lstm_hidden, lstm_hidden // r), 0.1),
        "se2_b2": jnp.zeros((lstm_hidden,), jnp.float32),
        # fc2: Linear(lstm_hidden, output_size)
        "fc2_w": u(ks[8], (output_size, lstm_hidden), 0.1),
        "fc2_b": jnp.zeros((output_size,), jnp.float32),
    }


# ----------------------------------------------------------------------------
# Wrapper: patch extraction, slab packing, pallas_call
# ----------------------------------------------------------------------------

def _pad2(a, rows, cols=LANES):
    return jnp.pad(a, ((0, rows - a.shape[0]), (0, cols - a.shape[1])))


def _pad_row(v):
    return jnp.pad(v.reshape(1, -1), ((0, 0), (0, LANES - v.shape[-1])))


def cnn_lstm_3_iter_forward(imgs, params, *, max_tile_rows=4096):
    """imgs: (B, frame, face, C, H, W) float32 (NCHW per image, like PyTorch)."""
    B, _frame_in, _face, C, H, W = imgs.shape
    frame = 2                     # hard-coded in the reference forward()
    face_id = 0                   # `for face_id in range(face)[:1]`
    x = imgs[:, :frame, face_id]                  # (B, 2, C, H, W)
    x = jnp.transpose(x, (1, 0, 2, 3, 4))         # time-major (frame, B, C, H, W)
    N = B * frame
    HW = H * W
    x = x.reshape(N, C, H, W)                     # row n = t*B + b

    # --- im2col as ONE XLA op (channel-major (c,kh,kw) patch ordering) --------
    patches = jax.lax.conv_general_dilated_patches(
        x, filter_shape=(3, 3), window_strides=(1, 1),
        padding=((1, 1), (1, 1)),
        dimension_numbers=("NCHW", "OIHW", "NCHW"))   # (N, C*9, H, W)
    CK = C * 9
    CKp = ((CK + 31) // 32) * 32                      # 27 -> 32
    patches = jnp.transpose(patches, (0, 2, 3, 1)).reshape(N * HW, CK)
    patches = jnp.pad(patches, ((0, 0), (0, CKp - CK))).astype(jnp.bfloat16)

    cnn_feat = params["conv_w"].shape[0]
    hidden = params["lstm_w_hh"].shape[1]
    out_size = params["fc2_w"].shape[0]
    assert 4 * hidden == LANES, "kernel assumes lstm_hidden == 32 (4H == 128 lanes)"

    # --- pack ALL weights into one lane-dense bf16 slab ----------------------
    # Blocks that multiply 128-wide activations are zero-padded to (128,128):
    # the zero rows null the don't-care lanes, so the head never lane-slices.
    wc  = _pad2(params["conv_w"].reshape(cnn_feat, -1).T, CKp)    # (CKp, 128)
    w1  = _pad2(params["fc1_w"].T, LANES)                         # (128, 128)
    wih = _pad2(params["lstm_w_ih"].T, LANES)                     # (128, 128)
    whh = _pad2(params["lstm_w_hh"].T, LANES)                     # (128, 128)
    sw1 = _pad2(params["se2_w1"].T, LANES)                        # (128, 128)
    sw2 = _pad2(params["se2_w2"].T, LANES)                        # (128, 128)
    wf  = _pad2(params["fc2_w"].T, LANES)                         # (128, 128)
    wslab = jnp.concatenate([wc, w1, wih, whh, sw1, sw2, wf],
                            axis=0).astype(jnp.bfloat16)          # (CKp+768, 128)
    R_W1, R_WIH, R_WHH = CKp, CKp + 128, CKp + 256
    R_SW1, R_SW2, R_WF = CKp + 384, CKp + 512, CKp + 640

    # --- pack ALL biases into one (8, 128) f32 slab ---------------------------
    bslab = jnp.concatenate([
        _pad_row(params["conv_b"]),
        _pad_row(params["fc1_b"]),
        _pad_row(params["lstm_b_ih"] + params["lstm_b_hh"]),
        _pad_row(params["se2_b1"]),
        _pad_row(params["se2_b2"]),
        _pad_row(params["fc2_b"]),
        jnp.zeros((2, LANES), jnp.float32)], axis=0)              # (8, 128)

    # --- grid over image tiles (pipelines the patches DMA, scales with B/HW) --
    ipt = max(1, min(N, max_tile_rows // HW))     # images per grid step
    while N % ipt:
        ipt -= 1
    tile_rows = ipt * HW
    num_tiles = N // ipt
    if num_tiles > 1 and tile_rows % 8:           # (8,128) tiling constraint
        ipt, tile_rows, num_tiles = N, N * HW, 1

    kernel = functools.partial(
        _fused_forward_kernel, B=B, frame=frame, ipt=ipt, HW=HW,
        hidden=hidden, out_size=out_size, CKp=CKp,
        R_W1=R_W1, R_WIH=R_WIH, R_WHH=R_WHH,
        R_SW1=R_SW1, R_SW2=R_SW2, R_WF=R_WF)

    yp = pl.pallas_call(
        kernel,
        out_shape=jax.ShapeDtypeStruct((B, LANES), jnp.float32),
        grid_spec=pltpu.PrefetchScalarGridSpec(
            num_scalar_prefetch=0,
            grid=(num_tiles,),
            in_specs=[
                pl.BlockSpec((tile_rows, CKp), lambda i: (i, 0)),        # pipelined
                pl.BlockSpec((wslab.shape[0], LANES), lambda i: (0, 0)),  # resident
                pl.BlockSpec((8, LANES), lambda i: (0, 0)),               # resident
            ],
            out_specs=pl.BlockSpec((B, LANES), lambda i: (0, 0)),
            scratch_shapes=[pltpu.VMEM((N, LANES), jnp.float32)],
        ),
        # The head (last step) consumes features produced by every grid step,
        # so this axis must be "arbitrary": a "parallel" split across v7x's two
        # TensorCores would break the cross-step scratch dependency (using both
        # TCs would require splitting the conv stage into its own call).
        compiler_params=pltpu.CompilerParams(
            dimension_semantics=("arbitrary",),
            vmem_limit_bytes=32 * 1024 * 1024),
    )(patches, wslab, bslab)
    return yp[:, :out_size]


if __name__ == "__main__":
    key = jax.random.PRNGKey(0)
    k_img, k_par = jax.random.split(key)

    # Small shapes consistent with the module's forward signature.
    B, frame, face, C, H, W = 2, 4, 2, 3, 16, 16
    imgs = jax.random.normal(k_img, (B, frame, face, C, H, W), jnp.float32)
    params = init_params(k_par)

    # max_tile_rows=512 -> 2 images (512 patch rows) per grid step, so the
    # pipelined multi-step grid path is exercised even at this tiny demo shape.
    fwd = jax.jit(functools.partial(cnn_lstm_3_iter_forward, max_tile_rows=512))
    y = fwd(imgs, params)
    jax.block_until_ready(y)

    assert y.shape == (B, 1), y.shape
    assert bool(jnp.all(jnp.isfinite(y)))
    print("KERNEL_OK")
</pallas_src>

<mosaic_0001>
module attributes {stable_mosaic.version = 11 : i64} {
  func.func @_fused_forward_kernel(%arg0: i32, %arg1: memref<512x32xbf16, #tpu.memory_space<vmem>>, %arg2: memref<800x128xbf16, #tpu.memory_space<vmem>>, %arg3: memref<8x128xf32, #tpu.memory_space<vmem>>, %arg4: memref<2x128xf32, #tpu.memory_space<vmem>>, %arg5: memref<4x128xf32, #tpu.memory_space<vmem>>) attributes {dimension_semantics = [#tpu.dimension_semantics<arbitrary>], iteration_bounds = array<i64: 2>, scalar_prefetch = 0 : i64, scratch_operands = 1 : i64, tpu.core_type = #tpu.core_type<tc>, window_params = [{transform_indices = @transform_0, window_bounds = array<i64: 512, 32>}, {pipeline_mode = #tpu.pipeline_mode<synchronous>, transform_indices = @transform_1, window_bounds = array<i64: 800, 128>}, {pipeline_mode = #tpu.pipeline_mode<synchronous>, transform_indices = @transform_2, window_bounds = array<i64: 8, 128>}, {pipeline_mode = #tpu.pipeline_mode<synchronous>, transform_indices = @transform_3, window_bounds = array<i64: 2, 128>}]} {
    %c0 = arith.constant 0 : index
    %c0_0 = arith.constant 0 : index
    %0 = vector.load %arg3[%c0, %c0_0] : memref<8x128xf32, #tpu.memory_space<vmem>>, vector<8x128xf32>
    %c0_1 = arith.constant 0 : index
    %c0_2 = arith.constant 0 : index
    %1 = vector.load %arg1[%c0_1, %c0_2] : memref<512x32xbf16, #tpu.memory_space<vmem>>, vector<512x32xbf16>
    %c0_3 = arith.constant 0 : index
    %c0_4 = arith.constant 0 : index
    %2 = vector.load %arg2[%c0_3, %c0_4] : memref<800x128xbf16, #tpu.memory_space<vmem>>, vector<32x128xbf16>
    %cst = arith.constant dense<0.000000e+00> : vector<512x128xf32>
    %3 = tpu.matmul %1, %2, %cst {dimension_numbers = #tpu.dot_dimension_numbers<[1], [0], [0], [1], [0, 0, 1, 1], [], []>} : vector<512x32xbf16>, vector<32x128xbf16>, vector<512x128xf32> -> vector<512x128xf32>
    %4 = vector.extract_strided_slice %0 {offsets = [0, 0], sizes = [1, 128], strides = [1, 1]} : vector<8x128xf32> to vector<1x128xf32>
    %5 = vector.broadcast %4 : vector<1x128xf32> to vector<512x128xf32>
    %6 = arith.addf %3, %5 : vector<512x128xf32>
    %cst_5 = arith.constant 0.000000e+00 : f32
    %7 = vector.broadcast %cst_5 : f32 to vector<512x128xf32>
    %8 = arith.maximumf %6, %7 : vector<512x128xf32>
    %9 = vector.shape_cast %8 : vector<512x128xf32> to vector<2x256x128xf32>
    %cst_6 = arith.constant dense<0.000000e+00> : vector<2x128xf32>
    %10 = vector.multi_reduction <add>, %9, %cst_6 [1] : vector<2x256x128xf32> to vector<2x128xf32>
    %cst_7 = arith.constant 3.906250e-03 : f32
    %11 = vector.broadcast %cst_7 : f32 to vector<2x128xf32>
    %12 = arith.mulf %10, %11 : vector<2x128xf32>
    %c2_i32 = arith.constant 2 : i32
    %13 = arith.muli %arg0, %c2_i32 : i32
    %14 = arith.index_cast %13 : i32 to index
    %c0_8 = arith.constant 0 : index
    %15 = vector.load %arg5[%14, %c0_8] : memref<4x128xf32, #tpu.memory_space<vmem>>, vector<2x128xf32>
    tpu.vector_store %arg5[%14, %c0_8], %12 {strides = array<i32>} : memref<4x128xf32, #tpu.memory_space<vmem>>, vector<2x128xf32>,
    %c1_i32 = arith.constant 1 : i32
    %16 = arith.cmpi eq, %arg0, %c1_i32 : i32
    %17 = arith.extui %16 : i1 to i32
    %c0_i32 = arith.constant 0 : i32
    %18 = arith.cmpi ne, %17, %c0_i32 : i32
    scf.if %18 {
      %c0_9 = arith.constant 0 : index
      %c0_10 = arith.constant 0 : index
      %19 = vector.load %arg5[%c0_9, %c0_10] : memref<4x128xf32, #tpu.memory_space<vmem>>, vector<4x128xf32>
      %20 = arith.truncf %19 : vector<4x128xf32> to vector<4x128xbf16>
      %c32 = arith.constant 32 : index
      %c0_11 = arith.constant 0 : index
      %21 = vector.load %arg2[%c32, %c0_11] : memref<800x128xbf16, #tpu.memory_space<vmem>>, vector<128x128xbf16>
      %cst_12 = arith.constant dense<0.000000e+00> : vector<4x128xf32>
      %22 = tpu.matmul %20, %21, %cst_12 {dimension_numbers = #tpu.dot_dimension_numbers<[1], [0], [0], [1], [0, 0, 1, 1], [], []>} : vector<4x128xbf16>, vector<128x128xbf16>, vector<4x128xf32> -> vector<4x128xf32>
      %23 = vector.extract_strided_slice %0 {offsets = [1, 0], sizes = [1, 128], strides = [1, 1]} : vector<8x128xf32> to vector<1x128xf32>
      %24 = vector.broadcast %23 : vector<1x128xf32> to vector<4x128xf32>
      %25 = arith.addf %22, %24 : vector<4x128xf32>
      %26 = arith.truncf %25 : vector<4x128xf32> to vector<4x128xbf16>
      %c160 = arith.constant 160 : index
      %c0_13 = arith.constant 0 : index
      %27 = vector.load %arg2[%c160, %c0_13] : memref<800x128xbf16, #tpu.memory_space<vmem>>, vector<128x128xbf16>
      %cst_14 = arith.constant dense<0.000000e+00> : vector<4x128xf32>
      %28 = tpu.matmul %26, %27, %cst_14 {dimension_numbers = #tpu.dot_dimension_numbers<[1], [0], [0], [1], [0, 0, 1, 1], [], []>} : vector<4x128xbf16>, vector<128x128xbf16>, vector<4x128xf32> -> vector<4x128xf32>
      %29 = vector.extract_strided_slice %0 {offsets = [2, 0], sizes = [1, 128], strides = [1, 1]} : vector<8x128xf32> to vector<1x128xf32>
      %30 = vector.broadcast %29 : vector<1x128xf32> to vector<4x128xf32>
      %31 = arith.addf %28, %30 : vector<4x128xf32>
      %c288 = arith.constant 288 : index
      %c0_15 = arith.constant 0 : index
      %32 = vector.load %arg2[%c288, %c0_15] : memref<800x128xbf16, #tpu.memory_space<vmem>>, vector<128x128xbf16>
      %33 = tpu.iota {dimensions = array<i32: 1>} : vector<2x128xi32>
      %c64_i32 = arith.constant 64 : i32
      %34 = vector.broadcast %c64_i32 : i32 to vector<2x128xi32>
      %35 = arith.cmpi sge, %33, %34 : vector<2x128xi32>
      %c96_i32 = arith.constant 96 : i32
      %36 = vector.broadcast %c96_i32 : i32 to vector<2x128xi32>
      %37 = arith.cmpi slt, %33, %36 : vector<2x128xi32>
      %38 = arith.andi %35, %37 : vector<2x128xi1>
      %cst_16 = arith.constant 0.000000e+00 : f32
      %39 = vector.broadcast %cst_16 : f32 to vector<2x128xf32>
      %cst_17 = arith.constant 0.000000e+00 : f32
      %40 = vector.broadcast %cst_17 : f32 to vector<2x128xf32>
      %41 = vector.extract_strided_slice %31 {offsets = [0, 0], sizes = [2, 128], strides = [1, 1]} : vector<4x128xf32> to vector<2x128xf32>
      %42 = arith.truncf %39 : vector<2x128xf32> to vector<2x128xbf16>
      %cst_18 = arith.constant dense<0.000000e+00> : vector<2x128xf32>
      %43 = tpu.matmul %42, %32, %cst_18 {dimension_numbers = #tpu.dot_dimension_numbers<[1], [0], [0], [1], [0, 0, 1, 1], [], []>} : vector<2x128xbf16>, vector<128x128xbf16>, vector<2x128xf32> -> vector<2x128xf32>
      %44 = arith.addf %41, %43 : vector<2x128xf32>
      %45 = math.tanh %44 : vector<2x128xf32>
      %46 = arith.negf %44 : vector<2x128xf32>
      %47 = math.exp %46 : vector<2x128xf32>
      %cst_19 = arith.constant 1.000000e+00 : f32
      %48 = vector.broadcast %cst_19 : f32 to vector<2x128xf32>
      %49 = arith.addf %48, %47 : vector<2x128xf32>
      %50 = arith.divf %48, %49 : vector<2x128xf32>
      %51 = arith.select %38, %45, %50 : vector<2x128xi1>, vector<2x128xf32>
      %c96_i32_20 = arith.constant 96 : i32
      %52 = tpu.dynamic_rotate %51 by %c96_i32_20 dim 1 : vector<2x128xf32>, i32 -> vector<2x128xf32>
      %c64_i32_21 = arith.constant 64 : i32
      %53 = tpu.dynamic_rotate %51 by %c64_i32_21 dim 1 : vector<2x128xf32>, i32 -> vector<2x128xf32>
      %c32_i32 = arith.constant 32 : i32
      %54 = tpu.dynamic_rotate %51 by %c32_i32 dim 1 : vector<2x128xf32>, i32 -> vector<2x128xf32>
      %55 = arith.mulf %52, %40 : vector<2x128xf32>
      %56 = arith.mulf %51, %53 : vector<2x128xf32>
      %57 = arith.addf %55, %56 : vector<2x128xf32>
      %58 = math.tanh %57 : vector<2x128xf32>
      %59 = arith.mulf %54, %58 : vector<2x128xf32>
      %60 = vector.extract_strided_slice %31 {offsets = [2, 0], sizes = [2, 128], strides = [1, 1]} : vector<4x128xf32> to vector<2x128xf32>
      %61 = arith.truncf %59 : vector<2x128xf32> to vector<2x128xbf16>
      %cst_22 = arith.constant dense<0.000000e+00> : vector<2x128xf32>
      %62 = tpu.matmul %61, %32, %cst_22 {dimension_numbers = #tpu.dot_dimension_numbers<[1], [0], [0], [1], [0, 0, 1, 1], [], []>} : vector<2x128xbf16>, vector<128x128xbf16>, vector<2x128xf32> -> vector<2x128xf32>
      %63 = arith.addf %60, %62 : vector<2x128xf32>
      %64 = math.tanh %63 : vector<2x128xf32>
      %65 = arith.negf %63 : vector<2x128xf32>
      %66 = math.exp %65 : vector<2x128xf32>
      %cst_23 = arith.constant 1.000000e+00 : f32
      %67 = vector.broadcast %cst_23 : f32 to vector<2x128xf32>
      %68 = arith.addf %67, %66 : vector<2x128xf32>
      %69 = arith.divf %67, %68 : vector<2x128xf32>
      %70 = arith.select %38, %64, %69 : vector<2x128xi1>, vector<2x128xf32>
      %c96_i32_24 = arith.constant 96 : i32
      %71 = tpu.dynamic_rotate %70 by %c96_i32_24 dim 1 : vector<2x128xf32>, i32 -> vector<2x128xf32>
      %c64_i32_25 = arith.constant 64 : i32
      %72 = tpu.dynamic_rotate %70 by %c64_i32_25 dim 1 : vector<2x128xf32>, i32 -> vector<2x128xf32>
      %c32_i32_26 = arith.constant 32 : i32
      %73 = tpu.dynamic_rotate %70 by %c32_i32_26 dim 1 : vector<2x128xf32>, i32 -> vector<2x128xf32>
      %74 = arith.mulf %71, %57 : vector<2x128xf32>
      %75 = arith.mulf %70, %72 : vector<2x128xf32>
      %76 = arith.addf %74, %75 : vector<2x128xf32>
      %77 = math.tanh %76 : vector<2x128xf32>
      %78 = arith.mulf %73, %77 : vector<2x128xf32>
      %79 = arith.truncf %78 : vector<2x128xf32> to vector<2x128xbf16>
      %c416 = arith.constant 416 : index
      %c0_27 = arith.constant 0 : index
      %80 = vector.load %arg2[%c416, %c0_27] : memref<800x128xbf16, #tpu.memory_space<vmem>>, vector<128x128xbf16>
      %cst_28 = arith.constant dense<0.000000e+00> : vector<2x128xf32>
      %81 = tpu.matmul %79, %80, %cst_28 {dimension_numbers = #tpu.dot_dimension_numbers<[1], [0], [0], [1], [0, 0, 1, 1], [], []>} : vector<2x128xbf16>, vector<128x128xbf16>, vector<2x128xf32> -> vector<2x128xf32>
      %82 = vector.extract_strided_slice %0 {offsets = [3, 0], sizes = [1, 128], strides = [1, 1]} : vector<8x128xf32> to vector<1x128xf32>
      %83 = vector.broadcast %82 : vector<1x128xf32> to vector<2x128xf32>
      %84 = arith.addf %81, %83 : vector<2x128xf32>
      %cst_29 = arith.constant 0.000000e+00 : f32
      %85 = vector.broadcast %cst_29 : f32 to vector<2x128xf32>
      %86 = arith.maximumf %84, %85 : vector<2x128xf32>
      %87 = arith.truncf %86 : vector<2x128xf32> to vector<2x128xbf16>
      %c544 = arith.constant 544 : index
      %c0_30 = arith.constant 0 : index
      %88 = vector.load %arg2[%c544, %c0_30] : memref<800x128xbf16, #tpu.memory_space<vmem>>, vector<128x128xbf16>
      %cst_31 = arith.constant dense<0.000000e+00> : vector<2x128xf32>
      %89 = tpu.matmul %87, %88, %cst_31 {dimension_numbers = #tpu.dot_dimension_numbers<[1], [0], [0], [1], [0, 0, 1, 1], [], []>} : vector<2x128xbf16>, vector<128x128xbf16>, vector<2x128xf32> -> vector<2x128xf32>
      %90 = vector.extract_strided_slice %0 {offsets = [4, 0], sizes = [1, 128], strides = [1, 1]} : vector<8x128xf32> to vector<1x128xf32>
      %91 = vector.broadcast %90 : vector<1x128xf32> to vector<2x128xf32>
      %92 = arith.addf %89, %91 : vector<2x128xf32>
      %93 = arith.negf %92 : vector<2x128xf32>
      %94 = math.exp %93 : vector<2x128xf32>
      %cst_32 = arith.constant 1.000000e+00 : f32
      %95 = vector.broadcast %cst_32 : f32 to vector<2x128xf32>
      %96 = arith.addf %95, %94 : vector<2x128xf32>
      %97 = arith.divf %95, %96 : vector<2x128xf32>
      %98 = arith.mulf %78, %97 : vector<2x128xf32>
      %99 = arith.truncf %98 : vector<2x128xf32> to vector<2x128xbf16>
      %c672 = arith.constant 672 : index
      %c0_33 = arith.constant 0 : index
      %100 = vector.load %arg2[%c672, %c0_33] : memref<800x128xbf16, #tpu.memory_space<vmem>>, vector<128x128xbf16>
      %cst_34 = arith.constant dense<0.000000e+00> : vector<2x128xf32>
      %101 = tpu.matmul %99, %100, %cst_34 {dimension_numbers = #tpu.dot_dimension_numbers<[1], [0], [0], [1], [0, 0, 1, 1], [], []>} : vector<2x128xbf16>, vector<128x128xbf16>, vector<2x128xf32> -> vector<2x128xf32>
      %102 = vector.extract_strided_slice %0 {offsets = [5, 0], sizes = [1, 128], strides = [1, 1]} : vector<8x128xf32> to vector<1x128xf32>
      %103 = vector.broadcast %102 : vector<1x128xf32> to vector<2x128xf32>
      %104 = arith.addf %101, %103 : vector<2x128xf32>
      %105 = tpu.iota {dimensions = array<i32: 1>} : vector<2x128xi32>
      %c1_i32_35 = arith.constant 1 : i32
      %106 = vector.broadcast %c1_i32_35 : i32 to vector<2x128xi32>
      %107 = arith.cmpi slt, %105, %106 : vector<2x128xi32>
      %cst_36 = arith.constant 0xFF800000 : f32
      %108 = vector.broadcast %cst_36 : f32 to vector<2x128xf32>
      %109 = arith.select %107, %104, %108 : vector<2x128xi1>, vector<2x128xf32>
      %cst_37 = arith.constant dense<0xFF800000> : vector<2xf32>
      %110 = vector.multi_reduction <maximumf>, %109, %cst_37 [1] : vector<2x128xf32> to vector<2xf32>
      %111 = vector.shape_cast %110 : vector<2xf32> to vector<2x1xf32>
      %112 = vector.broadcast %111 : vector<2x1xf32> to vector<2x128xf32>
      %113 = arith.subf %109, %112 : vector<2x128xf32>
      %114 = math.exp %113 : vector<2x128xf32>
      %cst_38 = arith.constant dense<0.000000e+00> : vector<2xf32>
      %115 = vector.multi_reduction <add>, %114, %cst_38 [1] : vector<2x128xf32> to vector<2xf32>
      %116 = vector.shape_cast %115 : vector<2xf32> to vector<2x1xf32>
      %117 = vector.broadcast %116 : vector<2x1xf32> to vector<2x128xf32>
      %118 = arith.divf %114, %117 : vector<2x128xf32>
      %cst_39 = arith.constant 0.000000e+00 : f32
      %119 = vector.broadcast %cst_39 : f32 to vector<2x128xf32>
      %120 = arith.select %107, %118, %119 : vector<2x128xi1>, vector<2x128xf32>
      %c0_40 = arith.constant 0 : index
      %c0_41 = arith.constant 0 : index
      %121 = vector.load %arg4[%c0_40, %c0_41] : memref<2x128xf32, #tpu.memory_space<vmem>>, vector<2x128xf32>
      tpu.vector_store %arg4[%c0_40, %c0_41], %120 {strides = array<i32>} : memref<2x128xf32, #tpu.memory_space<vmem>>, vector<2x128xf32>,
    } else {
    }
    return
  }
  func.func @transform_0(%arg0: i32) -> (i32, i32) {
    %c0_i32 = arith.constant 0 : i32
    %c0_i32_0 = arith.constant 0 : i32
    return %arg0, %c0_i32 : i32, i32
  }
  func.func @transform_1(%arg0: i32) -> (i32, i32) {
    %c0_i32 = arith.constant 0 : i32
    %c0_i32_0 = arith.constant 0 : i32
    %c0_i32_1 = arith.constant 0 : i32
    return %c0_i32, %c0_i32_0 : i32, i32
  }
  func.func @transform_2(%arg0: i32) -> (i32, i32) {
    %c0_i32 = arith.constant 0 : i32
    %c0_i32_0 = arith.constant 0 : i32
    %c0_i32_1 = arith.constant 0 : i32
    return %c0_i32, %c0_i32_0 : i32, i32
  }
  func.func @transform_3(%arg0: i32) -> (i32, i32) {
    %c0_i32 = arith.constant 0 : i32
    %c0_i32_0 = arith.constant 0 : i32
    %c0_i32_1 = arith.constant 0 : i32
    return %c0_i32, %c0_i32_0 : i32, i32
  }
}

</mosaic_0001>

<llo_original>
// kernel: cnn_lstm_3_iter_forward.1
$region0: #{cnn_lstm_3_iter_forward.1}
  #allocation0 [shape = 'u32[]', space=smem, size = 0x4, offset = 0x4, fixed_abs, tag = 'smem constant byte address 0x4 - core index']
  #allocation1 [shape = 'u32[72,128]{1,0:T(1,128)}', space=vmem, size = 0x9000, scoped, tag = 'internal scratch']
  #allocation2 [shape = 'f32[4,128]{1,0:T(4,128)}', space=vmem, size = 0x800, scoped, tag = 'scratch operand']
  %s0 = inlined_call_operand.vmem [shape: bf16[1024,32], index: 0, kind: input, shape index: {}]
  %s1 = inlined_call_operand.vmem [shape: bf16[800,128], index: 1, kind: input, shape index: {}]
  %s2 = inlined_call_operand.vmem [shape: f32[8,128], index: 2, kind: input, shape index: {}]
  %s3 = inlined_call_operand.vmem [shape: f32[2,128], index: 3, kind: output, shape index: {}]
  %s4 = sld [smem:[#allocation0]]
  $region49: #{cnn_lstm_3_iter_forward.1} parent=0
    _
  %s6 = ssub.s32 1, %s4
  %s7 = scalar_select 0, %s6, %s4
  loop: start=0, step=1, limit=4
  $region2: #{cnn_lstm_3_iter_forward.1} parent=0 // loop_pre_header
    _
  $region3: #{cnn_lstm_3_iter_forward.1} parent=0 // loop_header
    %s9 = sphi 0, %s13
    %p10 = scmp.ge.s32.totalorder %s9, 4
    %s19 = sphi 0, %s21
    %s22 = sphi 0, %s19
    %s23 = sphi 0, %s22
    %s39 = sphi 0, %s23
    %s43 = sphi 0, %s43
    %s45 = sphi 0, %s43
    %s46 = sphi 0, %s45
    %s60 = sphi 0, %s46
    %s64 = sphi 0, %s64
    %s66 = sphi 0, %s64
    %s67 = sphi 0, %s66
    %s81 = sphi 0, %s67
    %s85 = sphi 0, %s85
    %s87 = sphi 0, %s85
    %s88 = sphi 0, %s87
    %s102 = sphi 0, %s88
  $region4: #{cnn_lstm_3_iter_forward.1} parent=0 // loop_header_branch
    %12 = sbr.rel (%p10) target = $region8
  $region5: #{cnn_lstm_3_iter_forward.1} parent=0 // loop_body
    %s14 = ssub.s32 %s9, 1
    %s15 = ssub.s32 %s9, 2
    %s16 = sadd.s32 %s9, 1
    %s17 = ssub.s32 %s9, %s16
    %p18 = scmp.eq.s32.totalorder %s17, 0
    %s20 = sadd.s32 %s19, 1
    %s21 = scalar_select %p18, %s19, %s20
    %p24 = pneg %p18
    %p25 = scmp.eq.s32.totalorder %s9, 1
    %p26 = por %p24, %p25
    %p27 = scmp.ne.s32.totalorder %s19, %s22
    %p28 = scmp.eq.s32.totalorder %s9, 0
    %p29 = por %p27, %p28
    %p30 = scmp.ne.s32.totalorder %s19, %s22
    %p31 = scmp.eq.s32.totalorder %s14, 1
    %p32 = por %p30, %p31
    %p33 = scmp.ne.s32.totalorder %s22, %s23
    %p34 = scmp.eq.s32.totalorder %s14, 0
    %p35 = por %p33, %p34
    %p36 = scmp.ne.s32.totalorder %s22, %s23
    %p37 = scmp.eq.s32.totalorder %s15, 1
    %p38 = por %p36, %p37
    %p40 = scmp.ne.s32.totalorder %s23, %s39
    %p41 = scmp.eq.s32.totalorder %s15, 0
    %p42 = por %p40, %p41
    %s44 = sadd.s32 %s43, 1
    %p47 = scmp.eq.s32.totalorder %s9, 1
    %p48 = scmp.ne.s32.totalorder %s43, %s45
    %p49 = scmp.eq.s32.totalorder %s9, 0
    %p50 = por %p48, %p49
    %p51 = scmp.ne.s32.totalorder %s43, %s45
    %p52 = scmp.eq.s32.totalorder %s14, 1
    %p53 = por %p51, %p52
    %p54 = scmp.ne.s32.totalorder %s45, %s46
    %p55 = scmp.eq.s32.totalorder %s14, 0
    %p56 = por %p54, %p55
    %p57 = scmp.ne.s32.totalorder %s45, %s46
    %p58 = scmp.eq.s32.totalorder %s15, 1
    %p59 = por %p57, %p58
    %p61 = scmp.ne.s32.totalorder %s46, %s60
    %p62 = scmp.eq.s32.totalorder %s15, 0
    %p63 = por %p61, %p62
    %s65 = sadd.s32 %s64, 1
    %p68 = scmp.eq.s32.totalorder %s9, 1
    %p69 = scmp.ne.s32.totalorder %s64, %s66
    %p70 = scmp.eq.s32.totalorder %s9, 0
    %p71 = por %p69, %p70
    %p72 = scmp.ne.s32.totalorder %s64, %s66
    %p73 = scmp.eq.s32.totalorder %s14, 1
    %p74 = por %p72, %p73
    %p75 = scmp.ne.s32.totalorder %s66, %s67
    %p76 = scmp.eq.s32.totalorder %s14, 0
    %p77 = por %p75, %p76
    %p78 = scmp.ne.s32.totalorder %s66, %s67
    %p79 = scmp.eq.s32.totalorder %s15, 1
    %p80 = por %p78, %p79
    %p82 = scmp.ne.s32.totalorder %s67, %s81
    %p83 = scmp.eq.s32.totalorder %s15, 0
    %p84 = por %p82, %p83
    %s86 = sadd.s32 %s85, 1
    %p89 = scmp.eq.s32.totalorder %s9, 1
    %p90 = scmp.ne.s32.totalorder %s85, %s87
    %p91 = scmp.eq.s32.totalorder %s9, 0
    %p92 = por %p90, %p91
    %p93 = scmp.ne.s32.totalorder %s85, %s87
    %p94 = scmp.eq.s32.totalorder %s14, 1
    %p95 = por %p93, %p94
    %p96 = scmp.ne.s32.totalorder %s87, %s88
    %p97 = scmp.eq.s32.totalorder %s14, 0
    %p98 = por %p96, %p97
    %p99 = scmp.ne.s32.totalorder %s87, %s88
    %p100 = scmp.eq.s32.totalorder %s15, 1
    %p101 = por %p99, %p100
    %p103 = scmp.ne.s32.totalorder %s88, %s102
    %p104 = scmp.eq.s32.totalorder %s15, 0
    %p105 = por %p103, %p104
    %p106 = scmp.le.s32.totalorder 1, %s9
    %p107 = scmp.lt.s32.totalorder %s9, 3
    %p108 = pnand %p106, %p107
    %p109 = pneg %p108
    // Predicated region
    $region9: #{cnn_lstm_3_iter_forward.1} parent=5 // pred_check
      _
    $region10: #{cnn_lstm_3_iter_forward.1} parent=5 // pred_check_branch
      %111 = sbr.rel (%p108) target = $region12
    $region11: #{cnn_lstm_3_iter_forward.1} parent=5 // pred_region
      %s112 = ssub.s32 %s9, 1
      // Predicated region
      $region13: #{cnn_lstm_3_iter_forward.1} parent=11 // pred_check
        %p113 = pneg %p56
      $region14: #{cnn_lstm_3_iter_forward.1} parent=11 // pred_check_branch
        %115 = sbr.rel (%p113) target = $region16
      $region15: #{cnn_lstm_3_iter_forward.1} parent=11 // pred_region
        _
      $region16: #{cnn_lstm_3_iter_forward.1} parent=11 // pred_fallthru
        _
      // Predicated region
      $region17: #{cnn_lstm_3_iter_forward.1} parent=11 // pred_check
        %p116 = pneg %p77
      $region18: #{cnn_lstm_3_iter_forward.1} parent=11 // pred_check_branch
        %118 = sbr.rel (%p116) target = $region20
      $region19: #{cnn_lstm_3_iter_forward.1} parent=11 // pred_region
        _
      $region20: #{cnn_lstm_3_iter_forward.1} parent=11 // pred_fallthru
        _
    $region12: #{cnn_lstm_3_iter_forward.1} parent=5 // pred_fallthru
      _
    %p119 = scmp.lt.s32.totalorder %s9, 2
    // Predicated region
    $region21: #{cnn_lstm_3_iter_forward.1} parent=5 // pred_check
      %p120 = pneg %p119
    $region22: #{cnn_lstm_3_iter_forward.1} parent=5 // pred_check_branch
      %122 = sbr.rel (%p120) target = $region24
    $region23: #{cnn_lstm_3_iter_forward.1} parent=5 // pred_region
      // Predicated region
      $region25: #{cnn_lstm_3_iter_forward.1} parent=23 // pred_check
        %p123 = pneg %p29
      $region26: #{cnn_lstm_3_iter_forward.1} parent=23 // pred_check_branch
        %125 = sbr.rel (%p123) target = $region28
      $region27: #{cnn_lstm_3_iter_forward.1} parent=23 // pred_region
        %s126 = smul.u32 64, %s9
        %p127 = scmp.lt.s32.totalorder %s126, 127
        %s128 = scalar_select %p127, %s126, 127
        %s129 = smul.addr %s128, 4
        %s130 = scalar_lea.vmem %s0, %s129
        %s131 = smul.u32 64, %s9
      $region28: #{cnn_lstm_3_iter_forward.1} parent=23 // pred_fallthru
        _
    $region24: #{cnn_lstm_3_iter_forward.1} parent=5 // pred_fallthru
      _
    %p132 = scmp.le.s32.totalorder 1, %s9
    %p133 = scmp.lt.s32.totalorder %s9, 3
    %p134 = pnand %p132, %p133
    %p135 = pneg %p134
    // Predicated region
    $region29: #{cnn_lstm_3_iter_forward.1} parent=5 // pred_check
      _
    $region30: #{cnn_lstm_3_iter_forward.1} parent=5 // pred_check_branch
      %137 = sbr.rel (%p134) target = $region32
    $region31: #{cnn_lstm_3_iter_forward.1} parent=5 // pred_region
      %s138 = ssub.s32 %s9, 1
      %s139 = smul.u32 64, %s14
      %p140 = scmp.lt.s32.totalorder %s139, 127
      %s141 = scalar_select %p140, %s139, 127
      %s142 = smul.addr %s141, 4
      %s143 = scalar_lea.vmem %s0, %s142
      %p144 = pneg %p35
      %p145 = pneg %p32
      %p146 = pneg %p56
      %p147 = pneg %p53
      %p148 = pneg %p77
      %p149 = pneg %p74
      %p150 = pneg %p98
      %p151 = pneg %p95
      %s152 = smul.u32 64, %s14
      %p153 = scmp.lt.s32.totalorder %s152, 127
      %s154 = scalar_select %p153, %s152, 127
      %s155 = smul.addr %s154, 4
      %s156 = scalar_lea.vmem %s0, %s155
      %s157 = smul.u32 64, %s14
      %v159 = vld [vmem:[%s2] sm:$0xff]
      %v160 = vld [vmem:[%s156] sm:$0xf]
      %v161 = vld [vmem:[%s156 + $0x4] sm:$0xf]
      %v162 = vld [vmem:[%s156 + $0x8] sm:$0xf]
      %v163 = vld [vmem:[%s156 + $0xc] sm:$0xf]
      %v164 = vld [vmem:[%s156 + $0x10] sm:$0xf]
      %v165 = vld [vmem:[%s156 + $0x14] sm:$0xf]
      %v166 = vld [vmem:[%s156 + $0x18] sm:$0xf]
      %v167 = vld [vmem:[%s156 + $0x1c] sm:$0xf]
      %v168 = vld [vmem:[%s156 + $0x20] sm:$0xf]
      %v169 = vld [vmem:[%s156 + $0x24] sm:$0xf]
      %v170 = vld [vmem:[%s156 + $0x28] sm:$0xf]
      %v171 = vld [vmem:[%s156 + $0x2c] sm:$0xf]
      %v172 = vld [vmem:[%s156 + $0x30] sm:$0xf]
      %v173 = vld [vmem:[%s156 + $0x34] sm:$0xf]
      %v174 = vld [vmem:[%s156 + $0x38] sm:$0xf]
      %v175 = vld [vmem:[%s156 + $0x3c] sm:$0xf]
      %v176 = vld [vmem:[%s156 + $0x40] sm:$0xf]
      %v177 = vld [vmem:[%s156 + $0x44] sm:$0xf]
      %v178 = vld [vmem:[%s156 + $0x48] sm:$0xf]
      %v179 = vld [vmem:[%s156 + $0x4c] sm:$0xf]
      %v180 = vld [vmem:[%s156 + $0x50] sm:$0xf]
      %v181 = vld [vmem:[%s156 + $0x54] sm:$0xf]
      %v182 = vld [vmem:[%s156 + $0x58] sm:$0xf]
      %v183 = vld [vmem:[%s156 + $0x5c] sm:$0xf]
      %v184 = vld [vmem:[%s156 + $0x60] sm:$0xf]
      %v185 = vld [vmem:[%s156 + $0x64] sm:$0xf]
      %v186 = vld [vmem:[%s156 + $0x68] sm:$0xf]
      %v187 = vld [vmem:[%s156 + $0x6c] sm:$0xf]
      %v188 = vld [vmem:[%s156 + $0x70] sm:$0xf]
      %v189 = vld [vmem:[%s156 + $0x74] sm:$0xf]
      %v190 = vld [vmem:[%s156 + $0x78] sm:$0xf]
      %v191 = vld [vmem:[%s156 + $0x7c] sm:$0xf]
      %v192 = vld [vmem:[%s156 + $0x80] sm:$0xf]
      %v193 = vld [vmem:[%s156 + $0x84] sm:$0xf]
      %v194 = vld [vmem:[%s156 + $0x88] sm:$0xf]
      %v195 = vld [vmem:[%s156 + $0x8c] sm:$0xf]
      %v196 = vld [vmem:[%s156 + $0x90] sm:$0xf]
      %v197 = vld [vmem:[%s156 + $0x94] sm:$0xf]
      %v198 = vld [vmem:[%s156 + $0x98] sm:$0xf]
      %v199 = vld [vmem:[%s156 + $0x9c] sm:$0xf]
      %v200 = vld [vmem:[%s156 + $0xa0] sm:$0xf]
      %v201 = vld [vmem:[%s156 + $0xa4] sm:$0xf]
      %v202 = vld [vmem:[%s156 + $0xa8] sm:$0xf]
      %v203 = vld [vmem:[%s156 + $0xac] sm:$0xf]
      %v204 = vld [vmem:[%s156 + $0xb0] sm:$0xf]
      %v205 = vld [vmem:[%s156 + $0xb4] sm:$0xf]
      %v206 = vld [vmem:[%s156 + $0xb8] sm:$0xf]
      %v207 = vld [vmem:[%s156 + $0xbc] sm:$0xf]
      %v208 = vld [vmem:[%s156 + $0xc0] sm:$0xf]
      %v209 = vld [vmem:[%s156 + $0xc4] sm:$0xf]
      %v210 = vld [vmem:[%s156 + $0xc8] sm:$0xf]
      %v211 = vld [vmem:[%s156 + $0xcc] sm:$0xf]
      %v212 = vld [vmem:[%s156 + $0xd0] sm:$0xf]
      %v213 = vld [vmem:[%s156 + $0xd4] sm:$0xf]
      %v214 = vld [vmem:[%s156 + $0xd8] sm:$0xf]
      %v215 = vld [vmem:[%s156 + $0xdc] sm:$0xf]
      %v216 = vld [vmem:[%s156 + $0xe0] sm:$0xf]
      %v217 = vld [vmem:[%s156 + $0xe4] sm:$0xf]
      %v218 = vld [vmem:[%s156 + $0xe8] sm:$0xf]
      %v219 = vld [vmem:[%s156 + $0xec] sm:$0xf]
      %v220 = vld [vmem:[%s156 + $0xf0] sm:$0xf]
      %v221 = vld [vmem:[%s156 + $0xf4] sm:$0xf]
      %v222 = vld [vmem:[%s156 + $0xf8] sm:$0xf]
      %v223 = vld [vmem:[%s156 + $0xfc] sm:$0xf]
      %v224 = vld [vmem:[%s1] sm:$0xf]
      %v225 = vld [vmem:[%s1 + $0x4] sm:$0xf]
      %v226 = vld [vmem:[%s1 + $0x8] sm:$0xf]
      %v227 = vld [vmem:[%s1 + $0xc] sm:$0xf]
      %v228 = vperm.slane %v159, 0
      %v293 = vunpack.c.l.b16 %v160
      %v294 = vunpack.c.l.b16 %v161
      %v295 = vunpack.c.l.b16 %v162
      %v296 = vunpack.c.l.b16 %v163
      %v297 = vunpack.c.l.b16 %v164
      %v298 = vunpack.c.l.b16 %v165
      %v299 = vunpack.c.l.b16 %v166
      %v300 = vunpack.c.l.b16 %v167
      %v301 = vunpack.c.l.b16 %v168
      %v302 = vunpack.c.l.b16 %v169
      %v303 = vunpack.c.l.b16 %v170
      %v304 = vunpack.c.l.b16 %v171
      %v305 = vunpack.c.l.b16 %v172
      %v306 = vunpack.c.l.b16 %v173
      %v307 = vunpack.c.l.b16 %v174
      %v308 = vunpack.c.l.b16 %v175
      %v309 = vunpack.c.l.b16 %v176
      %v310 = vunpack.c.l.b16 %v177
      %v311 = vunpack.c.l.b16 %v178
      %v312 = vunpack.c.l.b16 %v179
      %v313 = vunpack.c.l.b16 %v180
      %v314 = vunpack.c.l.b16 %v181
      %v315 = vunpack.c.l.b16 %v182
      %v316 = vunpack.c.l.b16 %v183
      %v317 = vunpack.c.l.b16 %v184
      %v318 = vunpack.c.l.b16 %v185
      %v319 = vunpack.c.l.b16 %v186
      %v320 = vunpack.c.l.b16 %v187
      %v321 = vunpack.c.l.b16 %v188
      %v322 = vunpack.c.l.b16 %v189
      %v323 = vunpack.c.l.b16 %v190
      %v324 = vunpack.c.l.b16 %v191
      %v325 = vunpack.c.l.b16 %v192
      %v326 = vunpack.c.l.b16 %v193
      %v327 = vunpack.c.l.b16 %v194
      %v328 = vunpack.c.l.b16 %v195
      %v329 = vunpack.c.l.b16 %v196
      %v330 = vunpack.c.l.b16 %v197
      %v331 = vunpack.c.l.b16 %v198
      %v332 = vunpack.c.l.b16 %v199
      %v333 = vunpack.c.l.b16 %v200
      %v334 = vunpack.c.l.b16 %v201
      %v335 = vunpack.c.l.b16 %v202
      %v336 = vunpack.c.l.b16 %v203
      %v337 = vunpack.c.l.b16 %v204
      %v338 = vunpack.c.l.b16 %v205
      %v339 = vunpack.c.l.b16 %v206
      %v340 = vunpack.c.l.b16 %v207
      %v341 = vunpack.c.l.b16 %v208
      %v342 = vunpack.c.l.b16 %v209
      %v343 = vunpack.c.l.b16 %v210
      %v344 = vunpack.c.l.b16 %v211
      %v345 = vunpack.c.l.b16 %v212
      %v346 = vunpack.c.l.b16 %v213
      %v347 = vunpack.c.l.b16 %v214
      %v348 = vunpack.c.l.b16 %v215
      %v349 = vunpack.c.l.b16 %v216
      %v350 = vunpack.c.l.b16 %v217
      %v351 = vunpack.c.l.b16 %v218
      %v352 = vunpack.c.l.b16 %v219
      %v353 = vunpack.c.l.b16 %v220
      %v354 = vunpack.c.l.b16 %v221
      %v355 = vunpack.c.l.b16 %v222
      %v356 = vunpack.c.l.b16 %v223
      %v357 = vpack.c.b16 %v294, %v293
      %v358 = vpack.c.b16 %v296, %v295
      %v359 = vpack.c.b16 %v298, %v297
      %v360 = vpack.c.b16 %v300, %v299
      %v361 = vpack.c.b16 %v302, %v301
      %v362 = vpack.c.b16 %v304, %v303
      %v363 = vpack.c.b16 %v306, %v305
      %v364 = vpack.c.b16 %v308, %v307
      %v365 = vpack.c.b16 %v310, %v309
      %v366 = vpack.c.b16 %v312, %v311
      %v367 = vpack.c.b16 %v314, %v313
      %v368 = vpack.c.b16 %v316, %v315
      %v369 = vpack.c.b16 %v318, %v317
      %v370 = vpack.c.b16 %v320, %v319
      %v371 = vpack.c.b16 %v322, %v321
      %v372 = vpack.c.b16 %v324, %v323
      %v373 = vpack.c.b16 %v326, %v325
      %v374 = vpack.c.b16 %v328, %v327
      %v375 = vpack.c.b16 %v330, %v329
      %v376 = vpack.c.b16 %v332, %v331
      %v377 = vpack.c.b16 %v334, %v333
      %v378 = vpack.c.b16 %v336, %v335
      %v379 = vpack.c.b16 %v338, %v337
      %v380 = vpack.c.b16 %v340, %v339
      %v381 = vpack.c.b16 %v342, %v341
      %v382 = vpack.c.b16 %v344, %v343
      %v383 = vpack.c.b16 %v346, %v345
      %v384 = vpack.c.b16 %v348, %v347
      %v385 = vpack.c.b16 %v350, %v349
      %v386 = vpack.c.b16 %v352, %v351
      %v387 = vpack.c.b16 %v354, %v353
      %v388 = vpack.c.b16 %v356, %v355
      %v393 = vunpack.c.l.b16 %v224
      %v394 = vunpack.c.l.b16 %v225
      %v395 = vunpack.c.l.b16 %v226
      %v396 = vunpack.c.l.b16 %v227
      %v397 = vpack.c.b16 %v394, %v393
      %v398 = vpack.c.b16 %v396, %v395
      %vm401 = vcmask 261120
      %v403 = vsel %vm401, %v357, 0
      %v406 = vsel %vm401, %v358, 0
      %v409 = vsel %vm401, %v359, 0
      %v412 = vsel %vm401, %v360, 0
      %v415 = vsel %vm401, %v361, 0
      %v418 = vsel %vm401, %v362, 0
      %v421 = vsel %vm401, %v363, 0
      %v424 = vsel %vm401, %v364, 0
      %v427 = vsel %vm401, %v365, 0
      %v430 = vsel %vm401, %v366, 0
      %v433 = vsel %vm401, %v367, 0
      %v436 = vsel %vm401, %v368, 0
      %v439 = vsel %vm401, %v369, 0
      %v442 = vsel %vm401, %v370, 0
      %v445 = vsel %vm401, %v371, 0
      %v448 = vsel %vm401, %v372, 0
      %v451 = vsel %vm401, %v373, 0
      %v454 = vsel %vm401, %v374, 0
      %v457 = vsel %vm401, %v375, 0
      %v460 = vsel %vm401, %v376, 0
      %v463 = vsel %vm401, %v377, 0
      %v466 = vsel %vm401, %v378, 0
      %v469 = vsel %vm401, %v379, 0
      %v472 = vsel %vm401, %v380, 0
      %v475 = vsel %vm401, %v381, 0
      %v478 = vsel %vm401, %v382, 0
      %v481 = vsel %vm401, %v383, 0
      %v484 = vsel %vm401, %v384, 0
      %v487 = vsel %vm401, %v385, 0
      %v490 = vsel %vm401, %v386, 0
      %v493 = vsel %vm401, %v387, 0
      %v496 = vsel %vm401, %v388, 0
      %498 = vmatpush.bf16.msra.mxu0 0
      %499 = vmatpush.bf16.msra.mxu0 0
      %500 = vmatpush.bf16.msra.mxu0 0
      %501 = vmatpush.bf16.msra.mxu0 0
      %502 = vmatpush.bf16.msra.mxu0 0
      %503 = vmatpush.bf16.msra.mxu0 0
      %504 = vmatpush.bf16.msra.mxu0 %v398
      %505 = vmatpush.bf16.msra.mxu0 %v397
      %506 = vmatmul.bf16.gmra.mxu0 %v403
      %v507 = vpop.f32.mrf.mxu0
      %v508 = vadd.f32 %v228, %v507
      %v509 = vpop.f32.mrf.mxu0
      %v510 = vadd.f32 %v228, %v509
      %511 = vmatmul.bf16.gmra.mxu0 %v406
      %v512 = vpop.f32.mrf.mxu0
      %v513 = vadd.f32 %v228, %v512
      %v514 = vpop.f32.mrf.mxu0
      %v515 = vadd.f32 %v228, %v514
      %516 = vmatmul.bf16.gmra.mxu0 %v409
      %v517 = vpop.f32.mrf.mxu0
      %v518 = vadd.f32 %v228, %v517
      %v519 = vpop.f32.mrf.mxu0
      %v520 = vadd.f32 %v228, %v519
      %521 = vmatmul.bf16.gmra.mxu0 %v412
      %v522 = vpop.f32.mrf.mxu0
      %v523 = vadd.f32 %v228, %v522
      %v524 = vpop.f32.mrf.mxu0
      %v525 = vadd.f32 %v228, %v524
      %526 = vmatmul.bf16.gmra.mxu0 %v415
      %v527 = vpop.f32.mrf.mxu0
      %v528 = vadd.f32 %v228, %v527
      %v529 = vpop.f32.mrf.mxu0
      %v530 = vadd.f32 %v228, %v529
      %531 = vmatmul.bf16.gmra.mxu0 %v418
      %v532 = vpop.f32.mrf.mxu0
      %v533 = vadd.f32 %v228, %v532
      %v534 = vpop.f32.mrf.mxu0
      %v535 = vadd.f32 %v228, %v534
      %536 = vmatmul.bf16.gmra.mxu0 %v421
      %v537 = vpop.f32.mrf.mxu0
      %v538 = vadd.f32 %v228, %v537
      %v539 = vpop.f32.mrf.mxu0
      %v540 = vadd.f32 %v228, %v539
      %541 = vmatmul.bf16.gmra.mxu0 %v424
      %v542 = vpop.f32.mrf.mxu0
      %v543 = vadd.f32 %v228, %v542
      %v544 = vpop.f32.mrf.mxu0
      %v545 = vadd.f32 %v228, %v544
      %546 = vmatmul.bf16.gmra.mxu0 %v427
      %v547 = vpop.f32.mrf.mxu0
      %v548 = vadd.f32 %v228, %v547
      %v549 = vpop.f32.mrf.mxu0
      %v550 = vadd.f32 %v228, %v549
      %551 = vmatmul.bf16.gmra.mxu0 %v430
      %v552 = vpop.f32.mrf.mxu0
      %v553 = vadd.f32 %v228, %v552
      %v554 = vpop.f32.mrf.mxu0
      %v555 = vadd.f32 %v228, %v554
      %556 = vmatmul.bf16.gmra.mxu0 %v433
      %v557 = vpop.f32.mrf.mxu0
      %v558 = vadd.f32 %v228, %v557
      %v559 = vpop.f32.mrf.mxu0
      %v560 = vadd.f32 %v228, %v559
      %561 = vmatmul.bf16.gmra.mxu0 %v436
      %v562 = vpop.f32.mrf.mxu0
      %v563 = vadd.f32 %v228, %v562
      %v564 = vpop.f32.mrf.mxu0
      %v565 = vadd.f32 %v228, %v564
      %566 = vmatmul.bf16.gmra.mxu0 %v439
      %v567 = vpop.f32.mrf.mxu0
      %v568 = vadd.f32 %v228, %v567
      %v569 = vpop.f32.mrf.mxu0
      %v570 = vadd.f32 %v228, %v569
      %571 = vmatmul.bf16.gmra.mxu0 %v442
      %v572 = vpop.f32.mrf.mxu0
      %v573 = vadd.f32 %v228, %v572
      %v574 = vpop.f32.mrf.mxu0
      %v575 = vadd.f32 %v228, %v574
      %576 = vmatmul.bf16.gmra.mxu0 %v445
      %v577 = vpop.f32.mrf.mxu0
      %v578 = vadd.f32 %v228, %v577
      %v579 = vpop.f32.mrf.mxu0
      %v580 = vadd.f32 %v228, %v579
      %581 = vmatmul.bf16.gmra.mxu0 %v448
      %v582 = vpop.f32.mrf.mxu0
      %v583 = vadd.f32 %v228, %v582
      %v584 = vpop.f32.mrf.mxu0
      %v585 = vadd.f32 %v228, %v584
      %586 = vmatmul.bf16.gmra.mxu0 %v451
      %v587 = vpop.f32.mrf.mxu0
      %v588 = vadd.f32 %v228, %v587
      %v589 = vpop.f32.mrf.mxu0
      %v590 = vadd.f32 %v228, %v589
      %591 = vmatmul.bf16.gmra.mxu0 %v454
      %v592 = vpop.f32.mrf.mxu0
      %v593 = vadd.f32 %v228, %v592
      %v594 = vpop.f32.mrf.mxu0
      %v595 = vadd.f32 %v228, %v594
      %596 = vmatmul.bf16.gmra.mxu0 %v457
      %v597 = vpop.f32.mrf.mxu0
      %v598 = vadd.f32 %v228, %v597
      %v599 = vpop.f32.mrf.mxu0
      %v600 = vadd.f32 %v228, %v599
      %601 = vmatmul.bf16.gmra.mxu0 %v460
      %v602 = vpop.f32.mrf.mxu0
      %v603 = vadd.f32 %v228, %v602
      %v604 = vpop.f32.mrf.mxu0
      %v605 = vadd.f32 %v228, %v604
      %606 = vmatmul.bf16.gmra.mxu0 %v463
      %v607 = vpop.f32.mrf.mxu0
      %v608 = vadd.f32 %v228, %v607
      %v609 = vpop.f32.mrf.mxu0
      %v610 = vadd.f32 %v228, %v609
      %611 = vmatmul.bf16.gmra.mxu0 %v466
      %v612 = vpop.f32.mrf.mxu0
      %v613 = vadd.f32 %v228, %v612
      %v614 = vpop.f32.mrf.mxu0
      %v615 = vadd.f32 %v228, %v614
      %616 = vmatmul.bf16.gmra.mxu0 %v469
      %v617 = vpop.f32.mrf.mxu0
      %v618 = vadd.f32 %v228, %v617
      %v619 = vpop.f32.mrf.mxu0
      %v620 = vadd.f32 %v228, %v619
      %621 = vmatmul.bf16.gmra.mxu0 %v472
      %v622 = vpop.f32.mrf.mxu0
      %v623 = vadd.f32 %v228, %v622
      %v624 = vpop.f32.mrf.mxu0
      %v625 = vadd.f32 %v228, %v624
      %626 = vmatmul.bf16.gmra.mxu0 %v475
      %v627 = vpop.f32.mrf.mxu0
      %v628 = vadd.f32 %v228, %v627
      %v629 = vpop.f32.mrf.mxu0
      %v630 = vadd.f32 %v228, %v629
      %631 = vmatmul.bf16.gmra.mxu0 %v478
      %v632 = vpop.f32.mrf.mxu0
      %v633 = vadd.f32 %v228, %v632
      %v634 = vpop.f32.mrf.mxu0
      %v635 = vadd.f32 %v228, %v634
      %636 = vmatmul.bf16.gmra.mxu0 %v481
      %v637 = vpop.f32.mrf.mxu0
      %v638 = vadd.f32 %v228, %v637
      %v639 = vpop.f32.mrf.mxu0
      %v640 = vadd.f32 %v228, %v639
      %641 = vmatmul.bf16.gmra.mxu0 %v484
      %v642 = vpop.f32.mrf.mxu0
      %v643 = vadd.f32 %v228, %v642
      %v644 = vpop.f32.mrf.mxu0
      %v645 = vadd.f32 %v228, %v644
      %646 = vmatmul.bf16.gmra.mxu0 %v487
      %v647 = vpop.f32.mrf.mxu0
      %v648 = vadd.f32 %v228, %v647
      %v649 = vpop.f32.mrf.mxu0
      %v650 = vadd.f32 %v228, %v649
      %651 = vmatmul.bf16.gmra.mxu0 %v490
      %v652 = vpop.f32.mrf.mxu0
      %v653 = vadd.f32 %v228, %v652
      %v654 = vpop.f32.mrf.mxu0
      %v655 = vadd.f32 %v228, %v654
      %656 = vmatmul.bf16.gmra.mxu0 %v493
      %v657 = vpop.f32.mrf.mxu0
      %v658 = vadd.f32 %v228, %v657
      %v659 = vpop.f32.mrf.mxu0
      %v660 = vadd.f32 %v228, %v659
      %661 = vmatmul.bf16.gmra.mxu0 %v496
      %v662 = vpop.f32.mrf.mxu0
      %v663 = vadd.f32 %v228, %v662
      %v664 = vpop.f32.mrf.mxu0
      %v665 = vadd.f32 %v228, %v664
      %666 = vdwg.mxu0
      %v667 = vmax.f32 %v508, 0.0
      %v668 = vmax.f32 %v510, 0.0
      %v669 = vmax.f32 %v513, 0.0
      %v670 = vmax.f32 %v515, 0.0
      %v671 = vmax.f32 %v518, 0.0
      %v672 = vmax.f32 %v520, 0.0
      %v673 = vmax.f32 %v523, 0.0
      %v674 = vmax.f32 %v525, 0.0
      %v675 = vmax.f32 %v528, 0.0
      %v676 = vmax.f32 %v530, 0.0
      %v677 = vmax.f32 %v533, 0.0
      %v678 = vmax.f32 %v535, 0.0
      %v679 = vmax.f32 %v538, 0.0
      %v680 = vmax.f32 %v540, 0.0
      %v681 = vmax.f32 %v543, 0.0
      %v682 = vmax.f32 %v545, 0.0
      %v683 = vmax.f32 %v548, 0.0
      %v684 = vmax.f32 %v550, 0.0
      %v685 = vmax.f32 %v553, 0.0
      %v686 = vmax.f32 %v555, 0.0
      %v687 = vmax.f32 %v558, 0.0
      %v688 = vmax.f32 %v560, 0.0
      %v689 = vmax.f32 %v563, 0.0
      %v690 = vmax.f32 %v565, 0.0
      %v691 = vmax.f32 %v568, 0.0
      %v692 = vmax.f32 %v570, 0.0
      %v693 = vmax.f32 %v573, 0.0
      %v694 = vmax.f32 %v575, 0.0
      %v695 = vmax.f32 %v578, 0.0
      %v696 = vmax.f32 %v580, 0.0
      %v697 = vmax.f32 %v583, 0.0
      %v698 = vmax.f32 %v585, 0.0
      %v699 = vmax.f32 %v588, 0.0
      %v700 = vmax.f32 %v590, 0.0
      %v701 = vmax.f32 %v593, 0.0
      %v702 = vmax.f32 %v595, 0.0
      %v703 = vmax.f32 %v598, 0.0
      %v704 = vmax.f32 %v600, 0.0
      %v705 = vmax.f32 %v603, 0.0
      %v706 = vmax.f32 %v605, 0.0
      %v707 = vmax.f32 %v608, 0.0
      %v708 = vmax.f32 %v610, 0.0
      %v709 = vmax.f32 %v613, 0.0
      %v710 = vmax.f32 %v615, 0.0
      %v711 = vmax.f32 %v618, 0.0
      %v712 = vmax.f32 %v620, 0.0
      %v713 = vmax.f32 %v623, 0.0
      %v714 = vmax.f32 %v625, 0.0
      %v715 = vmax.f32 %v628, 0.0
      %v716 = vmax.f32 %v630, 0.0
      %v717 = vmax.f32 %v633, 0.0
      %v718 = vmax.f32 %v635, 0.0
      %v719 = vmax.f32 %v638, 0.0
      %v720 = vmax.f32 %v640, 0.0
      %v721 = vmax.f32 %v643, 0.0
      %v722 = vmax.f32 %v645, 0.0
      %v723 = vmax.f32 %v648, 0.0
      %v724 = vmax.f32 %v650, 0.0
      %v725 = vmax.f32 %v653, 0.0
      %v726 = vmax.f32 %v655, 0.0
      %v727 = vmax.f32 %v658, 0.0
      %v728 = vmax.f32 %v660, 0.0
      %v729 = vmax.f32 %v663, 0.0
      %v730 = vmax.f32 %v665, 0.0
      %v731 = vadd.f32 %v667, %v668
      %v732 = vadd.f32 %v731, %v669
      %v733 = vadd.f32 %v732, %v670
      %v734 = vadd.f32 %v733, %v671
      %v735 = vadd.f32 %v734, %v672
      %v736 = vadd.f32 %v735, %v673
      %v737 = vadd.f32 %v736, %v674
      %v738 = vadd.f32 %v737, %v675
      %v739 = vadd.f32 %v738, %v676
      %v740 = vadd.f32 %v739, %v677
      %v741 = vadd.f32 %v740, %v678
      %v742 = vadd.f32 %v741, %v679
      %v743 = vadd.f32 %v742, %v680
      %v744 = vadd.f32 %v743, %v681
      %v745 = vadd.f32 %v744, %v682
      %v746 = vadd.f32 %v745, %v683
      %v747 = vadd.f32 %v746, %v684
      %v748 = vadd.f32 %v747, %v685
      %v749 = vadd.f32 %v748, %v686
      %v750 = vadd.f32 %v749, %v687
      %v751 = vadd.f32 %v750, %v688
      %v752 = vadd.f32 %v751, %v689
      %v753 = vadd.f32 %v752, %v690
      %v754 = vadd.f32 %v753, %v691
      %v755 = vadd.f32 %v754, %v692
      %v756 = vadd.f32 %v755, %v693
      %v757 = vadd.f32 %v756, %v694
      %v758 = vadd.f32 %v757, %v695
      %v759 = vadd.f32 %v758, %v696
      %v760 = vadd.f32 %v759, %v697
      %v761 = vadd.f32 %v760, %v698
      %v762 = vrot.slane %v761, 4
      %v763 = vadd.f32 %v761, %v762
      %v764 = vrot.slane %v763, 2
      %v765 = vadd.f32 %v763, %v764
      %v766 = vrot.slane %v765, 1
      %v767 = vadd.f32 %v765, %v766
      %v768 = vadd.f32 %v699, %v700
      %v769 = vadd.f32 %v768, %v701
      %v770 = vadd.f32 %v769, %v702
      %v771 = vadd.f32 %v770, %v703
      %v772 = vadd.f32 %v771, %v704
      %v773 = vadd.f32 %v772, %v705
      %v774 = vadd.f32 %v773, %v706
      %v775 = vadd.f32 %v774, %v707
      %v776 = vadd.f32 %v775, %v708
      %v777 = vadd.f32 %v776, %v709
      %v778 = vadd.f32 %v777, %v710
      %v779 = vadd.f32 %v778, %v711
      %v780 = vadd.f32 %v779, %v712
      %v781 = vadd.f32 %v780, %v713
      %v782 = vadd.f32 %v781, %v714
      %v783 = vadd.f32 %v782, %v715
      %v784 = vadd.f32 %v783, %v716
      %v785 = vadd.f32 %v784, %v717
      %v786 = vadd.f32 %v785, %v718
      %v787 = vadd.f32 %v786, %v719
      %v788 = vadd.f32 %v787, %v720
      %v789 = vadd.f32 %v788, %v721
      %v790 = vadd.f32 %v789, %v722
      %v791 = vadd.f32 %v790, %v723
      %v792 = vadd.f32 %v791, %v724
      %v793 = vadd.f32 %v792, %v725
      %v794 = vadd.f32 %v793, %v726
      %v795 = vadd.f32 %v794, %v727
      %v796 = vadd.f32 %v795, %v728
      %v797 = vadd.f32 %v796, %v729
      %v798 = vadd.f32 %v797, %v730
      %v799 = vrot.slane %v798, 4
      %v800 = vadd.f32 %v798, %v799
      %v801 = vrot.slane %v800, 2
      %v802 = vadd.f32 %v800, %v801
      %v803 = vrot.slane %v802, 1
      %v804 = vadd.f32 %v802, %v803
      %v805 = vmul.f32 %v767, 0.00390625
      %v806 = vmul.f32 %v804, 0.00390625
      %s807 = smul.u32 %s14, 2
      %vm810 = vcmask 1041409
      %v811 = vsel %vm810, %v806, %v805
      %s813 = scalar_lea.vmem [#allocation2], %s807
      %814 = vst [vmem:[%s813] sm:$0x3] %v811
      %p815 = scmp.eq.s32.totalorder %s14, 1
      // Predicated region
      $region33: #{cnn_lstm_3_iter_forward.1} parent=31 // pred_check
        %p816 = pneg %p815
      $region34: #{cnn_lstm_3_iter_forward.1} parent=31 // pred_check_branch
        %818 = sbr.rel (%p816) target = $region36
      $region35: #{cnn_lstm_3_iter_forward.1} parent=31 // pred_region
        %v819 = vld [vmem:[#allocation2] sm:$0xf]
        %v820 = vpack.c.bf16 %v819, %v819
        %v821 = vld [vmem:[%s1 + $0x10] sm:$0xf]
        %v822 = vld [vmem:[%s1 + $0x14] sm:$0xf]
        %v823 = vld [vmem:[%s1 + $0x18] sm:$0xf]
        %v824 = vld [vmem:[%s1 + $0x1c] sm:$0xf]
        %v825 = vld [vmem:[%s1 + $0x20] sm:$0xf]
        %v826 = vld [vmem:[%s1 + $0x24] sm:$0xf]
        %v827 = vld [vmem:[%s1 + $0x28] sm:$0xf]
        %v828 = vld [vmem:[%s1 + $0x2c] sm:$0xf]
        %v829 = vld [vmem:[%s1 + $0x30] sm:$0xf]
        %v830 = vld [vmem:[%s1 + $0x34] sm:$0xf]
        %v831 = vld [vmem:[%s1 + $0x38] sm:$0xf]
        %v832 = vld [vmem:[%s1 + $0x3c] sm:$0xf]
        %v833 = vld [vmem:[%s1 + $0x40] sm:$0xf]
        %v834 = vld [vmem:[%s1 + $0x44] sm:$0xf]
        %v835 = vld [vmem:[%s1 + $0x48] sm:$0xf]
        %v836 = vld [vmem:[%s1 + $0x4c] sm:$0xf]
        %v837 = vperm.slane %v159, 1
        %v854 = vunpack.c.l.b16 %v821
        %v855 = vunpack.c.l.b16 %v822
        %v856 = vunpack.c.l.b16 %v823
        %v857 = vunpack.c.l.b16 %v824
        %v858 = vunpack.c.l.b16 %v825
        %v859 = vunpack.c.l.b16 %v826
        %v860 = vunpack.c.l.b16 %v827
        %v861 = vunpack.c.l.b16 %v828
        %v862 = vunpack.c.l.b16 %v829
        %v863 = vunpack.c.l.b16 %v830
        %v864 = vunpack.c.l.b16 %v831
        %v865 = vunpack.c.l.b16 %v832
        %v866 = vunpack.c.l.b16 %v833
        %v867 = vunpack.c.l.b16 %v834
        %v868 = vunpack.c.l.b16 %v835
        %v869 = vunpack.c.l.b16 %v836
        %v870 = vpack.c.b16 %v855, %v854
        %v871 = vpack.c.b16 %v857, %v856
        %v872 = vpack.c.b16 %v859, %v858
        %v873 = vpack.c.b16 %v861, %v860
        %v874 = vpack.c.b16 %v863, %v862
        %v875 = vpack.c.b16 %v865, %v864
        %v876 = vpack.c.b16 %v867, %v866
        %v877 = vpack.c.b16 %v869, %v868
        %886 = vmatpush.bf16.msra.mxu0 %v877
        %887 = vmatpush.bf16.msra.mxu0 %v876
        %888 = vmatpush.bf16.msra.mxu0 %v875
        %889 = vmatpush.bf16.msra.mxu0 %v874
        %890 = vmatpush.bf16.msra.mxu0 %v873
        %891 = vmatpush.bf16.msra.mxu0 %v872
        %892 = vmatpush.bf16.msra.mxu0 %v871
        %893 = vmatpush.bf16.msra.mxu0 %v870
        %894 = vmatmul.bf16.gmra.mxu0 %v820
        %v895 = vpop.f32.mrf.mxu0
        %v896 = vadd.f32 %v837, %v895
        %v897 = vpop.f32.mrf.mxu0
        %898 = vdwg.mxu0
        %v899 = vpack.c.bf16 %v896, %v896
        %v900 = vld [vmem:[%s1 + $0x50] sm:$0xf]
        %v901 = vld [vmem:[%s1 + $0x54] sm:$0xf]
        %v902 = vld [vmem:[%s1 + $0x58] sm:$0xf]
        %v903 = vld [vmem:[%s1 + $0x5c] sm:$0xf]
        %v904 = vld [vmem:[%s1 + $0x60] sm:$0xf]
        %v905 = vld [vmem:[%s1 + $0x64] sm:$0xf]
        %v906 = vld [vmem:[%s1 + $0x68] sm:$0xf]
        %v907 = vld [vmem:[%s1 + $0x6c] sm:$0xf]
        %v908 = vld [vmem:[%s1 + $0x70] sm:$0xf]
        %v909 = vld [vmem:[%s1 + $0x74] sm:$0xf]
        %v910 = vld [vmem:[%s1 + $0x78] sm:$0xf]
        %v911 = vld [vmem:[%s1 + $0x7c] sm:$0xf]
        %v912 = vld [vmem:[%s1 + $0x80] sm:$0xf]
        %v913 = vld [vmem:[%s1 + $0x84] sm:$0xf]
        %v914 = vld [vmem:[%s1 + $0x88] sm:$0xf]
        %v915 = vld [vmem:[%s1 + $0x8c] sm:$0xf]
        %v916 = vperm.slane %v159, 2
        %v933 = vunpack.c.l.b16 %v900
        %v934 = vunpack.c.l.b16 %v901
        %v935 = vunpack.c.l.b16 %v902
        %v936 = vunpack.c.l.b16 %v903
        %v937 = vunpack.c.l.b16 %v904
        %v938 = vunpack.c.l.b16 %v905
        %v939 = vunpack.c.l.b16 %v906
        %v940 = vunpack.c.l.b16 %v907
        %v941 = vunpack.c.l.b16 %v908
        %v942 = vunpack.c.l.b16 %v909
        %v943 = vunpack.c.l.b16 %v910
        %v944 = vunpack.c.l.b16 %v911
        %v945 = vunpack.c.l.b16 %v912
        %v946 = vunpack.c.l.b16 %v913
        %v947 = vunpack.c.l.b16 %v914
        %v948 = vunpack.c.l.b16 %v915
        %v949 = vpack.c.b16 %v934, %v933
        %v950 = vpack.c.b16 %v936, %v935
        %v951 = vpack.c.b16 %v938, %v937
        %v952 = vpack.c.b16 %v940, %v939
        %v953 = vpack.c.b16 %v942, %v941
        %v954 = vpack.c.b16 %v944, %v943
        %v955 = vpack.c.b16 %v946, %v945
        %v956 = vpack.c.b16 %v948, %v947
        %965 = vmatpush.bf16.msra.mxu0 %v956
        %966 = vmatpush.bf16.msra.mxu0 %v955
        %967 = vmatpush.bf16.msra.mxu0 %v954
        %968 = vmatpush.bf16.msra.mxu0 %v953
        %969 = vmatpush.bf16.msra.mxu0 %v952
        %970 = vmatpush.bf16.msra.mxu0 %v951
        %971 = vmatpush.bf16.msra.mxu0 %v950
        %972 = vmatpush.bf16.msra.mxu0 %v949
        %973 = vmatmul.bf16.gmra.mxu0 %v899
        %v974 = vpop.f32.mrf.mxu0
        %v975 = vadd.f32 %v916, %v974
        %v976 = vpop.f32.mrf.mxu0
        %977 = vdwg.mxu0
        %v978 = vld [vmem:[%s1 + $0x90] sm:$0xf]
        %v979 = vld [vmem:[%s1 + $0x94] sm:$0xf]
        %v980 = vld [vmem:[%s1 + $0x98] sm:$0xf]
        %v981 = vld [vmem:[%s1 + $0x9c] sm:$0xf]
        %v982 = vld [vmem:[%s1 + $0xa0] sm:$0xf]
        %v983 = vld [vmem:[%s1 + $0xa4] sm:$0xf]
        %v984 = vld [vmem:[%s1 + $0xa8] sm:$0xf]
        %v985 = vld [vmem:[%s1 + $0xac] sm:$0xf]
        %v986 = vld [vmem:[%s1 + $0xb0] sm:$0xf]
        %v987 = vld [vmem:[%s1 + $0xb4] sm:$0xf]
        %v988 = vld [vmem:[%s1 + $0xb8] sm:$0xf]
        %v989 = vld [vmem:[%s1 + $0xbc] sm:$0xf]
        %v990 = vld [vmem:[%s1 + $0xc0] sm:$0xf]
        %v991 = vld [vmem:[%s1 + $0xc4] sm:$0xf]
        %v992 = vld [vmem:[%s1 + $0xc8] sm:$0xf]
        %v993 = vld [vmem:[%s1 + $0xcc] sm:$0xf]
        %v994 = vlaneseq
        %v995 = vand.u32 %v994, 127
        %vm996 = vcmp.ge.s32.totalorder %v995, 64
        %vm997 = vcmp.lt.s32.totalorder %v995, 96
        %vm998 = vmand %vm996, %vm997
        %v1015 = vunpack.c.l.b16 %v978
        %v1016 = vunpack.c.l.b16 %v979
        %v1017 = vunpack.c.l.b16 %v980
        %v1018 = vunpack.c.l.b16 %v981
        %v1019 = vunpack.c.l.b16 %v982
        %v1020 = vunpack.c.l.b16 %v983
        %v1021 = vunpack.c.l.b16 %v984
        %v1022 = vunpack.c.l.b16 %v985
        %v1023 = vunpack.c.l.b16 %v986
        %v1024 = vunpack.c.l.b16 %v987
        %v1025 = vunpack.c.l.b16 %v988
        %v1026 = vunpack.c.l.b16 %v989
        %v1027 = vunpack.c.l.b16 %v990
        %v1028 = vunpack.c.l.b16 %v991
        %v1029 = vunpack.c.l.b16 %v992
        %v1030 = vunpack.c.l.b16 %v993
        %v1031 = vpack.c.b16 %v1016, %v1015
        %v1032 = vpack.c.b16 %v1018, %v1017
        %v1033 = vpack.c.b16 %v1020, %v1019
        %v1034 = vpack.c.b16 %v1022, %v1021
        %v1035 = vpack.c.b16 %v1024, %v1023
        %v1036 = vpack.c.b16 %v1026, %v1025
        %v1037 = vpack.c.b16 %v1028, %v1027
        %v1038 = vpack.c.b16 %v1030, %v1029
        %1047 = vmatpush.bf16.msra.mxu0 %v1038
        %1048 = vmatpush.bf16.msra.mxu0 %v1037
        %1049 = vmatpush.bf16.msra.mxu0 %v1036
        %1050 = vmatpush.bf16.msra.mxu0 %v1035
        %1051 = vmatpush.bf16.msra.mxu0 %v1034
        %1052 = vmatpush.bf16.msra.mxu0 %v1033
        %1053 = vmatpush.bf16.msra.mxu0 %v1032
        %1054 = vmatpush.bf16.msra.mxu0 %v1031
        %1055 = vmatmul.bf16.gmra.mxu0 0
        %v1056 = vpop.f32.mrf.mxu0
        %v1057 = vadd.f32 0.0, %v1056
        %v1058 = vpop.f32.mrf.mxu0
        %1059 = vdwg.mxu0
        %v1060 = vadd.f32 %v975, %v1057
        %v1061 = vtanh.pop %v1060
        %v1062 = vxor.u32 %v1060, 2147483648
        %v1063 = vmul.f32 %v1062, 1.442695
        %v1064 = vpow.pop %v1063
        %v1065 = vadd.f32 %v1064, 1.0
        %v1066 = vrcp.pop %v1065
        %v1067 = vmul.f32 %v1065, %v1066
        %v1068 = vsub.f32 1.0, %v1067
        %v1069 = vmul.f32 %v1066, %v1068
        %v1070 = vadd.f32 %v1066, %v1069
        %vm1071 = vweird.f32 %v1065
        %vm1072 = vweird.f32 %v1066
        %vm1073 = vmor %vm1071, %vm1072
        %v1074 = vsel %vm1073, %v1066, %v1070
        %v1075 = vand.u32 2147483647, %v1065
        %vm1076 = vcmp.eq.f32.partialorder %v1075, 8.507059e+37
        %v1077 = vand.u32 %v1065, 2147483648
        %v1078 = vor.u32 1.1754944e-38, %v1077
        %v1079 = vsel %vm1076, %v1078, %v1074
        %v1080 = vmul.f32 1.0, %v1079
        %v1081 = vsel %vm998, %v1061, %v1080
        %1082 = vrot.lane.b32.xlu0 %v1081, 96
        %v1083 = vpop.permute.xlu0 %1082
        %1084 = vrot.lane.b32.xlu0 %v1081, 64
        %v1085 = vpop.permute.xlu0 %1084
        %1086 = vrot.lane.b32.xlu0 %v1081, 32
        %v1087 = vpop.permute.xlu0 %1086
        %v1088 = vmul.f32 %v1083, 0.0
        %v1089 = vmul.f32 %v1081, %v1085
        %v1090 = vadd.f32 %v1088, %v1089
        %v1091 = vtanh.pop %v1090
        %v1092 = vmul.f32 %v1087, %v1091
        %v1093 = vpack.c.bf16 %v1092, %v1092
        %1094 = vmatpush.bf16.msra.mxu0 %v1038
        %1095 = vmatpush.bf16.msra.mxu0 %v1037
        %1096 = vmatpush.bf16.msra.mxu0 %v1036
        %1097 = vmatpush.bf16.msra.mxu0 %v1035
        %1098 = vmatpush.bf16.msra.mxu0 %v1034
        %1099 = vmatpush.bf16.msra.mxu0 %v1033
        %1100 = vmatpush.bf16.msra.mxu0 %v1032
        %1101 = vmatpush.bf16.msra.mxu0 %v1031
        %1102 = vmatmul.bf16.gmra.mxu0 %v1093
        %v1103 = vpop.f32.mrf.mxu0
        %v1104 = vadd.f32 0.0, %v1103
        %v1105 = vpop.f32.mrf.mxu0
        %1106 = vdwg.mxu0
        %v1108 = vrot.slane %v1104, 6
        %v1110 = vadd.f32 %v975, %v1108
        %v1111 = vtanh.pop %v1110
        %v1112 = vxor.u32 %v1110, 2147483648
        %v1113 = vmul.f32 %v1112, 1.442695
        %v1114 = vpow.pop %v1113
        %v1115 = vadd.f32 %v1114, 1.0
        %v1116 = vrcp.pop %v1115
        %v1117 = vmul.f32 %v1115, %v1116
        %v1118 = vsub.f32 1.0, %v1117
        %v1119 = vmul.f32 %v1116, %v1118
        %v1120 = vadd.f32 %v1116, %v1119
        %vm1121 = vweird.f32 %v1115
        %vm1122 = vweird.f32 %v1116
        %vm1123 = vmor %vm1121, %vm1122
        %v1124 = vsel %vm1123, %v1116, %v1120
        %v1125 = vand.u32 2147483647, %v1115
        %vm1126 = vcmp.eq.f32.partialorder %v1125, 8.507059e+37
        %v1127 = vand.u32 %v1115, 2147483648
        %v1128 = vor.u32 1.1754944e-38, %v1127
        %v1129 = vsel %vm1126, %v1128, %v1124
        %v1130 = vmul.f32 1.0, %v1129
        %v1131 = vsel %vm998, %v1111, %v1130
        %v1133 = vrot.slane %v1131, 2
        %1135 = vrot.lane.b32.xlu0 %v1133, 96
        %v1136 = vpop.permute.xlu0 %1135
        %1137 = vrot.lane.b32.xlu0 %v1133, 64
        %v1138 = vpop.permute.xlu0 %1137
        %1139 = vrot.lane.b32.xlu0 %v1133, 32
        %v1140 = vpop.permute.xlu0 %1139
        %v1141 = vmul.f32 %v1136, %v1090
        %v1143 = vrot.slane %v1138, 6
        %v1145 = vmul.f32 %v1131, %v1143
        %v1147 = vrot.slane %v1145, 2
        %v1149 = vadd.f32 %v1141, %v1147
        %v1150 = vtanh.pop %v1149
        %v1151 = vmul.f32 %v1140, %v1150
        %v1152 = vpack.c.bf16 %v1151, %v1151
        %v1153 = vld [vmem:[%s1 + $0xd0] sm:$0xf]
        %v1154 = vld [vmem:[%s1 + $0xd4] sm:$0xf]
        %v1155 = vld [vmem:[%s1 + $0xd8] sm:$0xf]
        %v1156 = vld [vmem:[%s1 + $0xdc] sm:$0xf]
        %v1157 = vld [vmem:[%s1 + $0xe0] sm:$0xf]
        %v1158 = vld [vmem:[%s1 + $0xe4] sm:$0xf]
        %v1159 = vld [vmem:[%s1 + $0xe8] sm:$0xf]
        %v1160 = vld [vmem:[%s1 + $0xec] sm:$0xf]
        %v1161 = vld [vmem:[%s1 + $0xf0] sm:$0xf]
        %v1162 = vld [vmem:[%s1 + $0xf4] sm:$0xf]
        %v1163 = vld [vmem:[%s1 + $0xf8] sm:$0xf]
        %v1164 = vld [vmem:[%s1 + $0xfc] sm:$0xf]
        %v1165 = vld [vmem:[%s1 + $0x100] sm:$0xf]
        %v1166 = vld [vmem:[%s1 + $0x104] sm:$0xf]
        %v1167 = vld [vmem:[%s1 + $0x108] sm:$0xf]
        %v1168 = vld [vmem:[%s1 + $0x10c] sm:$0xf]
        %v1169 = vperm.slane %v159, 3
        %v1186 = vunpack.c.l.b16 %v1153
        %v1187 = vunpack.c.l.b16 %v1154
        %v1188 = vunpack.c.l.b16 %v1155
        %v1189 = vunpack.c.l.b16 %v1156
        %v1190 = vunpack.c.l.b16 %v1157
        %v1191 = vunpack.c.l.b16 %v1158
        %v1192 = vunpack.c.l.b16 %v1159
        %v1193 = vunpack.c.l.b16 %v1160
        %v1194 = vunpack.c.l.b16 %v1161
        %v1195 = vunpack.c.l.b16 %v1162
        %v1196 = vunpack.c.l.b16 %v1163
        %v1197 = vunpack.c.l.b16 %v1164
        %v1198 = vunpack.c.l.b16 %v1165
        %v1199 = vunpack.c.l.b16 %v1166
        %v1200 = vunpack.c.l.b16 %v1167
        %v1201 = vunpack.c.l.b16 %v1168
        %v1202 = vpack.c.b16 %v1187, %v1186
        %v1203 = vpack.c.b16 %v1189, %v1188
        %v1204 = vpack.c.b16 %v1191, %v1190
        %v1205 = vpack.c.b16 %v1193, %v1192
        %v1206 = vpack.c.b16 %v1195, %v1194
        %v1207 = vpack.c.b16 %v1197, %v1196
        %v1208 = vpack.c.b16 %v1199, %v1198
        %v1209 = vpack.c.b16 %v1201, %v1200
        %1218 = vmatpush.bf16.msra.mxu0 %v1209
        %1219 = vmatpush.bf16.msra.mxu0 %v1208
        %1220 = vmatpush.bf16.msra.mxu0 %v1207
        %1221 = vmatpush.bf16.msra.mxu0 %v1206
        %1222 = vmatpush.bf16.msra.mxu0 %v1205
        %1223 = vmatpush.bf16.msra.mxu0 %v1204
        %1224 = vmatpush.bf16.msra.mxu0 %v1203
        %1225 = vmatpush.bf16.msra.mxu0 %v1202
        %1226 = vmatmul.bf16.gmra.mxu0 %v1152
        %v1227 = vpop.f32.mrf.mxu0
        %v1228 = vadd.f32 %v1169, %v1227
        %v1229 = vpop.f32.mrf.mxu0
        %1230 = vdwg.mxu0
        %v1231 = vmax.f32 %v1228, 0.0
        %v1232 = vpack.c.bf16 %v1231, %v1231
        %v1233 = vld [vmem:[%s1 + $0x110] sm:$0xf]
        %v1234 = vld [vmem:[%s1 + $0x114] sm:$0xf]
        %v1235 = vld [vmem:[%s1 + $0x118] sm:$0xf]
        %v1236 = vld [vmem:[%s1 + $0x11c] sm:$0xf]
        %v1237 = vld [vmem:[%s1 + $0x120] sm:$0xf]
        %v1238 = vld [vmem:[%s1 + $0x124] sm:$0xf]
        %v1239 = vld [vmem:[%s1 + $0x128] sm:$0xf]
        %v1240 = vld [vmem:[%s1 + $0x12c] sm:$0xf]
        %v1241 = vld [vmem:[%s1 + $0x130] sm:$0xf]
        %v1242 = vld [vmem:[%s1 + $0x134] sm:$0xf]
        %v1243 = vld [vmem:[%s1 + $0x138] sm:$0xf]
        %v1244 = vld [vmem:[%s1 + $0x13c] sm:$0xf]
        %v1245 = vld [vmem:[%s1 + $0x140] sm:$0xf]
        %v1246 = vld [vmem:[%s1 + $0x144] sm:$0xf]
        %v1247 = vld [vmem:[%s1 + $0x148] sm:$0xf]
        %v1248 = vld [vmem:[%s1 + $0x14c] sm:$0xf]
        %v1249 = vperm.slane %v159, 4
        %v1266 = vunpack.c.l.b16 %v1233
        %v1267 = vunpack.c.l.b16 %v1234
        %v1268 = vunpack.c.l.b16 %v1235
        %v1269 = vunpack.c.l.b16 %v1236
        %v1270 = vunpack.c.l.b16 %v1237
        %v1271 = vunpack.c.l.b16 %v1238
        %v1272 = vunpack.c.l.b16 %v1239
        %v1273 = vunpack.c.l.b16 %v1240
        %v1274 = vunpack.c.l.b16 %v1241
        %v1275 = vunpack.c.l.b16 %v1242
        %v1276 = vunpack.c.l.b16 %v1243
        %v1277 = vunpack.c.l.b16 %v1244
        %v1278 = vunpack.c.l.b16 %v1245
        %v1279 = vunpack.c.l.b16 %v1246
        %v1280 = vunpack.c.l.b16 %v1247
        %v1281 = vunpack.c.l.b16 %v1248
        %v1282 = vpack.c.b16 %v1267, %v1266
        %v1283 = vpack.c.b16 %v1269, %v1268
        %v1284 = vpack.c.b16 %v1271, %v1270
        %v1285 = vpack.c.b16 %v1273, %v1272
        %v1286 = vpack.c.b16 %v1275, %v1274
        %v1287 = vpack.c.b16 %v1277, %v1276
        %v1288 = vpack.c.b16 %v1279, %v1278
        %v1289 = vpack.c.b16 %v1281, %v1280
        %1298 = vmatpush.bf16.msra.mxu0 %v1289
        %1299 = vmatpush.bf16.msra.mxu0 %v1288
        %1300 = vmatpush.bf16.msra.mxu0 %v1287
        %1301 = vmatpush.bf16.msra.mxu0 %v1286
        %1302 = vmatpush.bf16.msra.mxu0 %v1285
        %1303 = vmatpush.bf16.msra.mxu0 %v1284
        %1304 = vmatpush.bf16.msra.mxu0 %v1283
        %1305 = vmatpush.bf16.msra.mxu0 %v1282
        %1306 = vmatmul.bf16.gmra.mxu0 %v1232
        %v1307 = vpop.f32.mrf.mxu0
        %v1308 = vadd.f32 %v1249, %v1307
        %v1309 = vpop.f32.mrf.mxu0
        %1310 = vdwg.mxu0
        %v1311 = vxor.u32 %v1308, 2147483648
        %v1312 = vmul.f32 %v1311, 1.442695
        %v1313 = vpow.pop %v1312
        %v1314 = vadd.f32 %v1313, 1.0
        %v1315 = vrcp.pop %v1314
        %v1316 = vmul.f32 %v1314, %v1315
        %v1317 = vsub.f32 1.0, %v1316
        %v1318 = vmul.f32 %v1315, %v1317
        %v1319 = vadd.f32 %v1315, %v1318
        %vm1320 = vweird.f32 %v1314
        %vm1321 = vweird.f32 %v1315
        %vm1322 = vmor %vm1320, %vm1321
        %v1323 = vsel %vm1322, %v1315, %v1319
        %v1324 = vand.u32 2147483647, %v1314
        %vm1325 = vcmp.eq.f32.partialorder %v1324, 8.507059e+37
        %v1326 = vand.u32 %v1314, 2147483648
        %v1327 = vor.u32 1.1754944e-38, %v1326
        %v1328 = vsel %vm1325, %v1327, %v1323
        %v1329 = vmul.f32 1.0, %v1328
        %v1330 = vmul.f32 %v1151, %v1329
        %v1331 = vpack.c.bf16 %v1330, %v1330
        %v1332 = vld [vmem:[%s1 + $0x150] sm:$0xf]
        %v1333 = vld [vmem:[%s1 + $0x154] sm:$0xf]
        %v1334 = vld [vmem:[%s1 + $0x158] sm:$0xf]
        %v1335 = vld [vmem:[%s1 + $0x15c] sm:$0xf]
        %v1336 = vld [vmem:[%s1 + $0x160] sm:$0xf]
        %v1337 = vld [vmem:[%s1 + $0x164] sm:$0xf]
        %v1338 = vld [vmem:[%s1 + $0x168] sm:$0xf]
        %v1339 = vld [vmem:[%s1 + $0x16c] sm:$0xf]
        %v1340 = vld [vmem:[%s1 + $0x170] sm:$0xf]
        %v1341 = vld [vmem:[%s1 + $0x174] sm:$0xf]
        %v1342 = vld [vmem:[%s1 + $0x178] sm:$0xf]
        %v1343 = vld [vmem:[%s1 + $0x17c] sm:$0xf]
        %v1344 = vld [vmem:[%s1 + $0x180] sm:$0xf]
        %v1345 = vld [vmem:[%s1 + $0x184] sm:$0xf]
        %v1346 = vld [vmem:[%s1 + $0x188] sm:$0xf]
        %v1347 = vld [vmem:[%s1 + $0x18c] sm:$0xf]
        %v1348 = vperm.slane %v159, 5
        %v1365 = vunpack.c.l.b16 %v1332
        %v1366 = vunpack.c.l.b16 %v1333
        %v1367 = vunpack.c.l.b16 %v1334
        %v1368 = vunpack.c.l.b16 %v1335
        %v1369 = vunpack.c.l.b16 %v1336
        %v1370 = vunpack.c.l.b16 %v1337
        %v1371 = vunpack.c.l.b16 %v1338
        %v1372 = vunpack.c.l.b16 %v1339
        %v1373 = vunpack.c.l.b16 %v1340
        %v1374 = vunpack.c.l.b16 %v1341
        %v1375 = vunpack.c.l.b16 %v1342
        %v1376 = vunpack.c.l.b16 %v1343
        %v1377 = vunpack.c.l.b16 %v1344
        %v1378 = vunpack.c.l.b16 %v1345
        %v1379 = vunpack.c.l.b16 %v1346
        %v1380 = vunpack.c.l.b16 %v1347
        %v1381 = vpack.c.b16 %v1366, %v1365
        %v1382 = vpack.c.b16 %v1368, %v1367
        %v1383 = vpack.c.b16 %v1370, %v1369
        %v1384 = vpack.c.b16 %v1372, %v1371
        %v1385 = vpack.c.b16 %v1374, %v1373
        %v1386 = vpack.c.b16 %v1376, %v1375
        %v1387 = vpack.c.b16 %v1378, %v1377
        %v1388 = vpack.c.b16 %v1380, %v1379
        %1397 = vmatpush.bf16.msra.mxu0 %v1388
        %1398 = vmatpush.bf16.msra.mxu0 %v1387
        %1399 = vmatpush.bf16.msra.mxu0 %v1386
        %1400 = vmatpush.bf16.msra.mxu0 %v1385
        %1401 = vmatpush.bf16.msra.mxu0 %v1384
        %1402 = vmatpush.bf16.msra.mxu0 %v1383
        %1403 = vmatpush.bf16.msra.mxu0 %v1382
        %1404 = vmatpush.bf16.msra.mxu0 %v1381
        %1405 = vmatmul.bf16.gmra.mxu0 %v1331
        %v1406 = vpop.f32.mrf.mxu0
        %v1407 = vadd.f32 %v1348, %v1406
        %v1408 = vpop.f32.mrf.mxu0
        %1409 = vdwg.mxu0
        %vm1410 = vcmp.lt.s32.totalorder %v995, 1
        %v1411 = vsel %vm1410, %v1407, -inf
        %vm1412 = vcmask 1041408
        %v1413 = vsel %vm1412, %v1411, -inf
        %1414 = vmax.xlane.f32.xlu0 %v1413
        %v1415 = vpop.xlane.xlu0 %1414
        %v1416 = vsub.f32 %v1411, %v1415
        %v1417 = vmul.f32 %v1416, 1.442695
        %v1418 = vpow.pop %v1417
        %v1419 = vsel %vm1412, %v1418, 0.0
        %1420 = vadd.xlane.f32.xlu0 %v1419
        %v1421 = vpop.xlane.xlu0 %1420
        %v1422 = vrcp.pop %v1421
        %v1423 = vmul.f32 %v1421, %v1422
        %v1424 = vsub.f32 1.0, %v1423
        %v1425 = vmul.f32 %v1422, %v1424
        %v1426 = vadd.f32 %v1422, %v1425
        %vm1427 = vweird.f32 %v1421
        %vm1428 = vweird.f32 %v1422
        %vm1429 = vmor %vm1427, %vm1428
        %v1430 = vsel %vm1429, %v1422, %v1426
        %v1431 = vand.u32 2147483647, %v1421
        %vm1432 = vcmp.eq.f32.partialorder %v1431, 8.507059e+37
        %v1433 = vand.u32 %v1421, 2147483648
        %v1434 = vor.u32 1.1754944e-38, %v1433
        %v1435 = vsel %vm1432, %v1434, %v1430
        %v1436 = vmul.f32 %v1418, %v1435
        %v1437 = vsel %vm1410, %v1436, 0.0
        %1438 = vst [vmem:[%s3] sm:$0x3] %v1437
      $region36: #{cnn_lstm_3_iter_forward.1} parent=31 // pred_fallthru
        _
      // Predicated region
      $region37: #{cnn_lstm_3_iter_forward.1} parent=31 // pred_check
        %p1439 = pneg %p95
      $region38: #{cnn_lstm_3_iter_forward.1} parent=31 // pred_check_branch
        %1441 = sbr.rel (%p1439) target = $region40
      $region39: #{cnn_lstm_3_iter_forward.1} parent=31 // pred_region
        _
      $region40: #{cnn_lstm_3_iter_forward.1} parent=31 // pred_fallthru
        _
      // Predicated region
      $region41: #{cnn_lstm_3_iter_forward.1} parent=31 // pred_check
        %p1442 = pneg %p95
      $region42: #{cnn_lstm_3_iter_forward.1} parent=31 // pred_check_branch
        %1444 = sbr.rel (%p1442) target = $region44
      $region43: #{cnn_lstm_3_iter_forward.1} parent=31 // pred_region
        _
      $region44: #{cnn_lstm_3_iter_forward.1} parent=31 // pred_fallthru
        _
    $region32: #{cnn_lstm_3_iter_forward.1} parent=5 // pred_fallthru
      _
    %p1445 = scmp.le.s32.totalorder 2, %s9
    // Predicated region
    $region45: #{cnn_lstm_3_iter_forward.1} parent=5 // pred_check
      %p1446 = pneg %p1445
    $region46: #{cnn_lstm_3_iter_forward.1} parent=5 // pred_check_branch
      %1448 = sbr.rel (%p1446) target = $region48
    $region47: #{cnn_lstm_3_iter_forward.1} parent=5 // pred_region
      %s1449 = ssub.s32 %s9, 2
    $region48: #{cnn_lstm_3_iter_forward.1} parent=5 // pred_fallthru
      _
  $region6: #{cnn_lstm_3_iter_forward.1} parent=0 // loop_footer
    %s13 = sadd.s32 1, %s9
  $region7: #{cnn_lstm_3_iter_forward.1} parent=0 // loop_footer_branch
    %8 = sbr.rel target = $region3
  $region8: #{cnn_lstm_3_iter_forward.1} parent=0 // loop_exit
    _

</llo_original>
